<compile_context>
chip_gen: v5e
topology: v5e:2x2
jax: 0.10.0
libtpu: 0.0.40
codegen_flags: <defaults>
</compile_context>

<pallas_src>
import jax
import jax.numpy as jnp
from jax.experimental import pallas as pl
from jax.experimental.pallas import tpu as pltpu

TM = 512                       # rows of the flattened (M, C) matrix per step
VMEM_LIMIT = 32 * 1024 * 1024  # scoped VMEM for the larger tiles


# ----------------------------- Pallas kernels ------------------------------ #
def _fused_matmul_bn_relu_kernel(x_ref, w_ref, s_ref, b_ref, o_ref):
    y = jnp.dot(x_ref[...], w_ref[...], preferred_element_type=jnp.float32)
    y = y * s_ref[...] + b_ref[...]
    o_ref[...] = jnp.maximum(y, 0.0).astype(o_ref.dtype)


def _fused_matmul_bn_res_relu_kernel(x_ref, w_ref, s_ref, b_ref, r_ref, o_ref):
    y = jnp.dot(x_ref[...], w_ref[...], preferred_element_type=jnp.float32)
    y = y * s_ref[...] + b_ref[...] + r_ref[...].astype(jnp.float32)
    o_ref[...] = jnp.maximum(y, 0.0).astype(o_ref.dtype)


def _conv2_slab_kernel(x0_ref, x1_ref, x2_ref, w_ref, s_ref, b_ref, o_ref):
    """3x3x3 conv (pad=1) on one (n, d) output slab via 27 accumulated matmuls."""
    H, W, Cout = o_ref.shape
    Cin = x0_ref.shape[-1]
    acc = jnp.zeros((H * W, Cout), jnp.float32)
    for kd, slab_ref in enumerate((x0_ref, x1_ref, x2_ref)):
        slab = slab_ref[...]                                 # (H+2, W+2, Cin) bf16
        for kh in range(3):
            for kw in range(3):
                win = slab[kh:kh + H, kw:kw + W, :].reshape(H * W, Cin)
                acc = acc + jnp.dot(win, w_ref[kd * 9 + kh * 3 + kw],
                                    preferred_element_type=jnp.float32)
    y = acc * s_ref[...] + b_ref[...]
    o_ref[...] = jnp.maximum(y, 0.0).reshape(H, W, Cout).astype(o_ref.dtype)


# ------------------------------ kernel wrappers ----------------------------- #
def fused_matmul_bn_relu(x2d, w, scale, bias, residual=None, out_dtype=None):
    """relu((x2d @ w) * scale + bias [+ residual]) in one Pallas kernel."""
    M, K = x2d.shape
    Kw, Cout = w.shape
    assert K == Kw
    out_dtype = x2d.dtype if out_dtype is None else out_dtype
    tm = M if M <= TM else TM
    grid = (pl.cdiv(M, tm),)

    scale2 = scale.reshape(1, Cout).astype(jnp.float32)
    bias2 = bias.reshape(1, Cout).astype(jnp.float32)

    in_specs = [
        pl.BlockSpec((tm, K), lambda i: (i, 0)),
        pl.BlockSpec((K, Cout), lambda i: (0, 0)),
        pl.BlockSpec((1, Cout), lambda i: (0, 0)),
        pl.BlockSpec((1, Cout), lambda i: (0, 0)),
    ]
    args = [x2d, w, scale2, bias2]
    kernel = _fused_matmul_bn_relu_kernel
    if residual is not None:
        in_specs.append(pl.BlockSpec((tm, Cout), lambda i: (i, 0)))
        args.append(residual)
        kernel = _fused_matmul_bn_res_relu_kernel

    return pl.pallas_call(
        kernel,
        out_shape=jax.ShapeDtypeStruct((M, Cout), out_dtype),
        grid=grid,
        in_specs=in_specs,
        out_specs=pl.BlockSpec((tm, Cout), lambda i: (i, 0)),
        compiler_params=pltpu.CompilerParams(
            dimension_semantics=("parallel",),
            vmem_limit_bytes=VMEM_LIMIT),
    )(*args)


def conv2_3x3x3_bn_relu(xp, w_taps, scale, bias):
    """relu(bn(conv3x3x3(x, pad=1))). xp is the zero-padded NDHWC activation."""
    N, Dp, Hp, Wp, C = xp.shape
    D, H, W = Dp - 2, Hp - 2, Wp - 2
    Cout = w_taps.shape[-1]

    scale2 = scale.reshape(1, Cout).astype(jnp.float32)
    bias2 = bias.reshape(1, Cout).astype(jnp.float32)

    # Three views of the same padded array: padded D-slabs d, d+1, d+2 per step.
    in_specs = [
        pl.BlockSpec((None, None, Hp, Wp, C),
                     lambda n, d, kd=kd: (n, d + kd, 0, 0, 0))
        for kd in range(3)
    ] + [
        pl.BlockSpec((27, C, Cout), lambda n, d: (0, 0, 0)),
        pl.BlockSpec((1, Cout), lambda n, d: (0, 0)),
        pl.BlockSpec((1, Cout), lambda n, d: (0, 0)),
    ]

    return pl.pallas_call(
        _conv2_slab_kernel,
        out_shape=jax.ShapeDtypeStruct((N, D, H, W, Cout), jnp.bfloat16),
        grid=(N, D),
        in_specs=in_specs,
        out_specs=pl.BlockSpec((None, None, H, W, Cout),
                               lambda n, d: (n, d, 0, 0, 0)),
        compiler_params=pltpu.CompilerParams(
            dimension_semantics=("parallel", "parallel"),
            vmem_limit_bytes=VMEM_LIMIT),
    )(xp, xp, xp, w_taps, scale2, bias2)


# ------------------------------- glue helpers ------------------------------ #
def _fold_bn(bn_params, eps=1e-5):
    gamma, beta, mean, var = bn_params
    scale = gamma * jax.lax.rsqrt(var + eps)
    return scale, beta - mean * scale


def bottleneck3d_forward(x_ncdhw, params):
    """Bottleneck3d.forward (stride=1, groups=1, dilation=1, downsample=None)."""
    N, Cin, D, H, W = x_ncdhw.shape
    # NCDHW -> NDHWC, cast to bf16 once (fuses with the transpose in XLA).
    x = jnp.transpose(x_ncdhw, (0, 2, 3, 4, 1)).astype(jnp.bfloat16)
    M = N * D * H * W
    x2d = x.reshape(M, Cin)

    # conv1 (1x1x1) + bn1 + relu
    w1 = params["conv1_w"]                               # (width, inplanes, 1,1,1)
    width = w1.shape[0]
    s1, b1 = _fold_bn(params["bn1"])
    t1 = fused_matmul_bn_relu(
        x2d, w1[:, :, 0, 0, 0].T.astype(jnp.bfloat16), s1, b1,
        out_dtype=jnp.bfloat16)                          # (M, width) bf16

    # conv2 (3x3x3, pad=1) + bn2 + relu : slab kernel, no im2col
    t1p = jnp.pad(t1.reshape(N, D, H, W, width),
                  ((0, 0), (1, 1), (1, 1), (1, 1), (0, 0)))
    w2 = params["conv2_w"]                               # (width, width, 3, 3, 3)
    w2_taps = jnp.transpose(w2, (2, 3, 4, 1, 0)).reshape(
        27, width, width).astype(jnp.bfloat16)           # (tap, in, out)
    s2, b2 = _fold_bn(params["bn2"])
    t2 = conv2_3x3x3_bn_relu(t1p, w2_taps, s2, b2)       # (N, D, H, W, width) bf16

    # conv3 (1x1x1) + bn3 + residual + relu
    w3 = params["conv3_w"]                               # (planes*4, width, 1,1,1)
    cout = w3.shape[0]
    assert cout == Cin, "downsample=None requires inplanes == planes * expansion"
    s3, b3 = _fold_bn(params["bn3"])
    out = fused_matmul_bn_relu(
        t2.reshape(M, width), w3[:, :, 0, 0, 0].T.astype(jnp.bfloat16),
        s3, b3, residual=x2d, out_dtype=jnp.float32)     # (M, cout) f32

    return jnp.transpose(out.reshape(N, D, H, W, cout), (0, 4, 1, 2, 3))


# ---------------------------- pure-JAX reference --------------------------- #
def _reference_forward(x, params, eps=1e-5):
    def bn(y, p):
        g, b, m, v = (t.reshape(1, -1, 1, 1, 1) for t in p)
        return g * (y - m) / jnp.sqrt(v + eps) + b

    def conv(y, w, pad):
        dn = jax.lax.conv_dimension_numbers(y.shape, w.shape,
                                            ("NCDHW", "OIDHW", "NCDHW"))
        return jax.lax.conv_general_dilated(y, w, (1, 1, 1), pad,
                                            dimension_numbers=dn)

    out = jax.nn.relu(bn(conv(x, params["conv1_w"], "VALID"), params["bn1"]))
    out = jax.nn.relu(bn(conv(out, params["conv2_w"],
                              ((1, 1), (1, 1), (1, 1))), params["bn2"]))
    out = bn(conv(out, params["conv3_w"], "VALID"), params["bn3"]) + x
    return jax.nn.relu(out)


# ---------------------------------- main ----------------------------------- #
def _make_params(inplanes, planes, key):
    width = planes                      # base_width=64, groups=1
    cout = planes * 4                   # expansion
    k1, k2, k3 = jax.random.split(key, 3)

    def bn_params(c):
        idx = jnp.arange(c, dtype=jnp.float32)
        gamma = 1.0 + 0.10 * idx / c
        beta = 0.05 * idx
        mean = 0.01 * idx
        var = 1.0 + 0.02 * idx
        return (gamma, beta, mean, var)

    return {
        "conv1_w": 0.1 * jax.random.normal(k1, (width, inplanes, 1, 1, 1), jnp.float32),
        "conv2_w": 0.1 * jax.random.normal(k2, (width, width, 3, 3, 3), jnp.float32),
        "conv3_w": 0.1 * jax.random.normal(k3, (cout, width, 1, 1, 1), jnp.float32),
        "bn1": bn_params(width),
        "bn2": bn_params(width),
        "bn3": bn_params(cout),
    }


if __name__ == "__main__":
    key = jax.random.PRNGKey(0)
    kx, kp = jax.random.split(key)

    inplanes, planes = 16, 4            # planes*expansion == inplanes (no downsample)
    N, D, H, W = 2, 4, 4, 4
    x = jax.random.normal(kx, (N, inplanes, D, H, W), jnp.float32)
    params = _make_params(inplanes, planes, kp)

    out = jax.block_until_ready(jax.jit(bottleneck3d_forward)(x, params))
    ref = jax.block_until_ready(_reference_forward(x, params))

    assert out.shape == (N, inplanes, D, H, W)
    assert out.dtype == jnp.float32
    # bf16 MXU inputs (f32 accumulation) vs a pure-f32 reference -> 2e-2 tolerance.
    assert jnp.allclose(out, ref, rtol=2e-2, atol=2e-2), "mismatch vs reference"
    print("KERNEL_OK")
</pallas_src>

<mosaic_0001>
module attributes {stable_mosaic.version = 11 : i64} {
  func.func @_fused_matmul_bn_relu_kernel(%arg0: i32, %arg1: memref<128x16xbf16, #tpu.memory_space<vmem>>, %arg2: memref<16x4xbf16, #tpu.memory_space<vmem>>, %arg3: memref<1x4xf32, #tpu.memory_space<vmem>>, %arg4: memref<1x4xf32, #tpu.memory_space<vmem>>, %arg5: memref<128x4xbf16, #tpu.memory_space<vmem>>) attributes {dimension_semantics = [#tpu.dimension_semantics<parallel>], iteration_bounds = array<i64: 1>, scalar_prefetch = 0 : i64, scratch_operands = 0 : i64, tpu.core_type = #tpu.core_type<tc>, window_params = [{transform_indices = @transform_0, window_bounds = array<i64: 128, 16>}, {pipeline_mode = #tpu.pipeline_mode<synchronous>, transform_indices = @transform_1, window_bounds = array<i64: 16, 4>}, {pipeline_mode = #tpu.pipeline_mode<synchronous>, transform_indices = @transform_2, window_bounds = array<i64: 1, 4>}, {pipeline_mode = #tpu.pipeline_mode<synchronous>, transform_indices = @transform_3, window_bounds = array<i64: 1, 4>}, {transform_indices = @transform_4, window_bounds = array<i64: 128, 4>}]} {
    %c0 = arith.constant 0 : index
    %c0_0 = arith.constant 0 : index
    %0 = vector.load %arg1[%c0, %c0_0] : memref<128x16xbf16, #tpu.memory_space<vmem>>, vector<128x16xbf16>
    %c0_1 = arith.constant 0 : index
    %c0_2 = arith.constant 0 : index
    %1 = vector.load %arg2[%c0_1, %c0_2] : memref<16x4xbf16, #tpu.memory_space<vmem>>, vector<16x4xbf16>
    %cst = arith.constant dense<0.000000e+00> : vector<128x4xf32>
    %2 = tpu.matmul %0, %1, %cst {dimension_numbers = #tpu.dot_dimension_numbers<[1], [0], [0], [1], [0, 0, 1, 1], [], []>} : vector<128x16xbf16>, vector<16x4xbf16>, vector<128x4xf32> -> vector<128x4xf32>
    %c0_3 = arith.constant 0 : index
    %c0_4 = arith.constant 0 : index
    %3 = vector.load %arg3[%c0_3, %c0_4] : memref<1x4xf32, #tpu.memory_space<vmem>>, vector<1x4xf32>
    %4 = vector.broadcast %3 : vector<1x4xf32> to vector<128x4xf32>
    %5 = arith.mulf %2, %4 : vector<128x4xf32>
    %c0_5 = arith.constant 0 : index
    %c0_6 = arith.constant 0 : index
    %6 = vector.load %arg4[%c0_5, %c0_6] : memref<1x4xf32, #tpu.memory_space<vmem>>, vector<1x4xf32>
    %7 = vector.broadcast %6 : vector<1x4xf32> to vector<128x4xf32>
    %8 = arith.addf %5, %7 : vector<128x4xf32>
    %cst_7 = arith.constant 0.000000e+00 : f32
    %9 = vector.broadcast %cst_7 : f32 to vector<128x4xf32>
    %10 = arith.maximumf %8, %9 : vector<128x4xf32>
    %11 = arith.truncf %10 : vector<128x4xf32> to vector<128x4xbf16>
    %c0_8 = arith.constant 0 : index
    %c0_9 = arith.constant 0 : index
    %12 = vector.load %arg5[%c0_8, %c0_9] : memref<128x4xbf16, #tpu.memory_space<vmem>>, vector<128x4xbf16>
    tpu.vector_store %arg5[%c0_8, %c0_9], %11 {strides = array<i32>} : memref<128x4xbf16, #tpu.memory_space<vmem>>, vector<128x4xbf16>,
    return
  }
  func.func @transform_0(%arg0: i32) -> (i32, i32) {
    %c0_i32 = arith.constant 0 : i32
    %c0_i32_0 = arith.constant 0 : i32
    return %arg0, %c0_i32 : i32, i32
  }
  func.func @transform_1(%arg0: i32) -> (i32, i32) {
    %c0_i32 = arith.constant 0 : i32
    %c0_i32_0 = arith.constant 0 : i32
    %c0_i32_1 = arith.constant 0 : i32
    return %c0_i32, %c0_i32_0 : i32, i32
  }
  func.func @transform_2(%arg0: i32) -> (i32, i32) {
    %c0_i32 = arith.constant 0 : i32
    %c0_i32_0 = arith.constant 0 : i32
    %c0_i32_1 = arith.constant 0 : i32
    return %c0_i32, %c0_i32_0 : i32, i32
  }
  func.func @transform_3(%arg0: i32) -> (i32, i32) {
    %c0_i32 = arith.constant 0 : i32
    %c0_i32_0 = arith.constant 0 : i32
    %c0_i32_1 = arith.constant 0 : i32
    return %c0_i32, %c0_i32_0 : i32, i32
  }
  func.func @transform_4(%arg0: i32) -> (i32, i32) {
    %c0_i32 = arith.constant 0 : i32
    %c0_i32_0 = arith.constant 0 : i32
    return %arg0, %c0_i32 : i32, i32
  }
}

module attributes {stable_mosaic.version = 11 : i64} {
  func.func @_conv2_slab_kernel(%arg0: i32, %arg1: i32, %arg2: memref<1x1x6x6x4xbf16, #tpu.memory_space<vmem>>, %arg3: memref<1x1x6x6x4xbf16, #tpu.memory_space<vmem>>, %arg4: memref<1x1x6x6x4xbf16, #tpu.memory_space<vmem>>, %arg5: memref<27x4x4xbf16, #tpu.memory_space<vmem>>, %arg6: memref<1x4xf32, #tpu.memory_space<vmem>>, %arg7: memref<1x4xf32, #tpu.memory_space<vmem>>, %arg8: memref<1x1x4x4x4xbf16, #tpu.memory_space<vmem>>) attributes {dimension_semantics = [#tpu.dimension_semantics<parallel>, #tpu.dimension_semantics<parallel>], iteration_bounds = array<i64: 2, 4>, scalar_prefetch = 0 : i64, scratch_operands = 0 : i64, tpu.core_type = #tpu.core_type<tc>, window_params = [{transform_indices = @transform_0, window_bounds = array<i64: 1, 1, 6, 6, 4>}, {transform_indices = @transform_1, window_bounds = array<i64: 1, 1, 6, 6, 4>}, {transform_indices = @transform_2, window_bounds = array<i64: 1, 1, 6, 6, 4>}, {pipeline_mode = #tpu.pipeline_mode<synchronous>, transform_indices = @transform_3, window_bounds = array<i64: 27, 4, 4>}, {pipeline_mode = #tpu.pipeline_mode<synchronous>, transform_indices = @transform_4, window_bounds = array<i64: 1, 4>}, {pipeline_mode = #tpu.pipeline_mode<synchronous>, transform_indices = @transform_5, window_bounds = array<i64: 1, 4>}, {transform_indices = @transform_6, window_bounds = array<i64: 1, 1, 4, 4, 4>}]} {
    %cst = arith.constant 0.000000e+00 : f32
    %0 = vector.broadcast %cst : f32 to vector<16x4xf32>
    %c0 = arith.constant 0 : index
    %c0_0 = arith.constant 0 : index
    %c0_1 = arith.constant 0 : index
    %c0_2 = arith.constant 0 : index
    %c0_3 = arith.constant 0 : index
    %1 = vector.load %arg2[%c0, %c0_0, %c0_1, %c0_2, %c0_3] : memref<1x1x6x6x4xbf16, #tpu.memory_space<vmem>>, vector<1x1x6x6x4xbf16>
    %2 = vector.shape_cast %1 : vector<1x1x6x6x4xbf16> to vector<6x6x4xbf16>
    %3 = vector.extract_strided_slice %2 {offsets = [0, 0, 0], sizes = [4, 4, 4], strides = [1, 1, 1]} : vector<6x6x4xbf16> to vector<4x4x4xbf16>
    %4 = vector.shape_cast %3 : vector<4x4x4xbf16> to vector<16x4xbf16>
    %c0_4 = arith.constant 0 : index
    %c0_5 = arith.constant 0 : index
    %c0_6 = arith.constant 0 : index
    %5 = vector.load %arg5[%c0_4, %c0_5, %c0_6] : memref<27x4x4xbf16, #tpu.memory_space<vmem>>, vector<1x4x4xbf16>
    %6 = vector.shape_cast %5 : vector<1x4x4xbf16> to vector<4x4xbf16>
    %cst_7 = arith.constant dense<0.000000e+00> : vector<16x4xf32>
    %7 = tpu.matmul %4, %6, %cst_7 {dimension_numbers = #tpu.dot_dimension_numbers<[1], [0], [0], [1], [0, 0, 1, 1], [], []>} : vector<16x4xbf16>, vector<4x4xbf16>, vector<16x4xf32> -> vector<16x4xf32>
    %8 = arith.addf %0, %7 : vector<16x4xf32>
    %9 = vector.extract_strided_slice %2 {offsets = [0, 1, 0], sizes = [4, 4, 4], strides = [1, 1, 1]} : vector<6x6x4xbf16> to vector<4x4x4xbf16>
    %10 = vector.shape_cast %9 : vector<4x4x4xbf16> to vector<16x4xbf16>
    %c1 = arith.constant 1 : index
    %c0_8 = arith.constant 0 : index
    %c0_9 = arith.constant 0 : index
    %11 = vector.load %arg5[%c1, %c0_8, %c0_9] : memref<27x4x4xbf16, #tpu.memory_space<vmem>>, vector<1x4x4xbf16>
    %12 = vector.shape_cast %11 : vector<1x4x4xbf16> to vector<4x4xbf16>
    %cst_10 = arith.constant dense<0.000000e+00> : vector<16x4xf32>
    %13 = tpu.matmul %10, %12, %cst_10 {dimension_numbers = #tpu.dot_dimension_numbers<[1], [0], [0], [1], [0, 0, 1, 1], [], []>} : vector<16x4xbf16>, vector<4x4xbf16>, vector<16x4xf32> -> vector<16x4xf32>
    %14 = arith.addf %8, %13 : vector<16x4xf32>
    %15 = vector.extract_strided_slice %2 {offsets = [0, 2, 0], sizes = [4, 4, 4], strides = [1, 1, 1]} : vector<6x6x4xbf16> to vector<4x4x4xbf16>
    %16 = vector.shape_cast %15 : vector<4x4x4xbf16> to vector<16x4xbf16>
    %c2 = arith.constant 2 : index
    %c0_11 = arith.constant 0 : index
    %c0_12 = arith.constant 0 : index
    %17 = vector.load %arg5[%c2, %c0_11, %c0_12] : memref<27x4x4xbf16, #tpu.memory_space<vmem>>, vector<1x4x4xbf16>
    %18 = vector.shape_cast %17 : vector<1x4x4xbf16> to vector<4x4xbf16>
    %cst_13 = arith.constant dense<0.000000e+00> : vector<16x4xf32>
    %19 = tpu.matmul %16, %18, %cst_13 {dimension_numbers = #tpu.dot_dimension_numbers<[1], [0], [0], [1], [0, 0, 1, 1], [], []>} : vector<16x4xbf16>, vector<4x4xbf16>, vector<16x4xf32> -> vector<16x4xf32>
    %20 = arith.addf %14, %19 : vector<16x4xf32>
    %21 = vector.extract_strided_slice %2 {offsets = [1, 0, 0], sizes = [4, 4, 4], strides = [1, 1, 1]} : vector<6x6x4xbf16> to vector<4x4x4xbf16>
    %22 = vector.shape_cast %21 : vector<4x4x4xbf16> to vector<16x4xbf16>
    %c3 = arith.constant 3 : index
    %c0_14 = arith.constant 0 : index
    %c0_15 = arith.constant 0 : index
    %23 = vector.load %arg5[%c3, %c0_14, %c0_15] : memref<27x4x4xbf16, #tpu.memory_space<vmem>>, vector<1x4x4xbf16>
    %24 = vector.shape_cast %23 : vector<1x4x4xbf16> to vector<4x4xbf16>
    %cst_16 = arith.constant dense<0.000000e+00> : vector<16x4xf32>
    %25 = tpu.matmul %22, %24, %cst_16 {dimension_numbers = #tpu.dot_dimension_numbers<[1], [0], [0], [1], [0, 0, 1, 1], [], []>} : vector<16x4xbf16>, vector<4x4xbf16>, vector<16x4xf32> -> vector<16x4xf32>
    %26 = arith.addf %20, %25 : vector<16x4xf32>
    %27 = vector.extract_strided_slice %2 {offsets = [1, 1, 0], sizes = [4, 4, 4], strides = [1, 1, 1]} : vector<6x6x4xbf16> to vector<4x4x4xbf16>
    %28 = vector.shape_cast %27 : vector<4x4x4xbf16> to vector<16x4xbf16>
    %c4 = arith.constant 4 : index
    %c0_17 = arith.constant 0 : index
    %c0_18 = arith.constant 0 : index
    %29 = vector.load %arg5[%c4, %c0_17, %c0_18] : memref<27x4x4xbf16, #tpu.memory_space<vmem>>, vector<1x4x4xbf16>
    %30 = vector.shape_cast %29 : vector<1x4x4xbf16> to vector<4x4xbf16>
    %cst_19 = arith.constant dense<0.000000e+00> : vector<16x4xf32>
    %31 = tpu.matmul %28, %30, %cst_19 {dimension_numbers = #tpu.dot_dimension_numbers<[1], [0], [0], [1], [0, 0, 1, 1], [], []>} : vector<16x4xbf16>, vector<4x4xbf16>, vector<16x4xf32> -> vector<16x4xf32>
    %32 = arith.addf %26, %31 : vector<16x4xf32>
    %33 = vector.extract_strided_slice %2 {offsets = [1, 2, 0], sizes = [4, 4, 4], strides = [1, 1, 1]} : vector<6x6x4xbf16> to vector<4x4x4xbf16>
    %34 = vector.shape_cast %33 : vector<4x4x4xbf16> to vector<16x4xbf16>
    %c5 = arith.constant 5 : index
    %c0_20 = arith.constant 0 : index
    %c0_21 = arith.constant 0 : index
    %35 = vector.load %arg5[%c5, %c0_20, %c0_21] : memref<27x4x4xbf16, #tpu.memory_space<vmem>>, vector<1x4x4xbf16>
    %36 = vector.shape_cast %35 : vector<1x4x4xbf16> to vector<4x4xbf16>
    %cst_22 = arith.constant dense<0.000000e+00> : vector<16x4xf32>
    %37 = tpu.matmul %34, %36, %cst_22 {dimension_numbers = #tpu.dot_dimension_numbers<[1], [0], [0], [1], [0, 0, 1, 1], [], []>} : vector<16x4xbf16>, vector<4x4xbf16>, vector<16x4xf32> -> vector<16x4xf32>
    %38 = arith.addf %32, %37 : vector<16x4xf32>
    %39 = vector.extract_strided_slice %2 {offsets = [2, 0, 0], sizes = [4, 4, 4], strides = [1, 1, 1]} : vector<6x6x4xbf16> to vector<4x4x4xbf16>
    %40 = vector.shape_cast %39 : vector<4x4x4xbf16> to vector<16x4xbf16>
    %c6 = arith.constant 6 : index
    %c0_23 = arith.constant 0 : index
    %c0_24 = arith.constant 0 : index
    %41 = vector.load %arg5[%c6, %c0_23, %c0_24] : memref<27x4x4xbf16, #tpu.memory_space<vmem>>, vector<1x4x4xbf16>
    %42 = vector.shape_cast %41 : vector<1x4x4xbf16> to vector<4x4xbf16>
    %cst_25 = arith.constant dense<0.000000e+00> : vector<16x4xf32>
    %43 = tpu.matmul %40, %42, %cst_25 {dimension_numbers = #tpu.dot_dimension_numbers<[1], [0], [0], [1], [0, 0, 1, 1], [], []>} : vector<16x4xbf16>, vector<4x4xbf16>, vector<16x4xf32> -> vector<16x4xf32>
    %44 = arith.addf %38, %43 : vector<16x4xf32>
    %45 = vector.extract_strided_slice %2 {offsets = [2, 1, 0], sizes = [4, 4, 4], strides = [1, 1, 1]} : vector<6x6x4xbf16> to vector<4x4x4xbf16>
    %46 = vector.shape_cast %45 : vector<4x4x4xbf16> to vector<16x4xbf16>
    %c7 = arith.constant 7 : index
    %c0_26 = arith.constant 0 : index
    %c0_27 = arith.constant 0 : index
    %47 = vector.load %arg5[%c7, %c0_26, %c0_27] : memref<27x4x4xbf16, #tpu.memory_space<vmem>>, vector<1x4x4xbf16>
    %48 = vector.shape_cast %47 : vector<1x4x4xbf16> to vector<4x4xbf16>
    %cst_28 = arith.constant dense<0.000000e+00> : vector<16x4xf32>
    %49 = tpu.matmul %46, %48, %cst_28 {dimension_numbers = #tpu.dot_dimension_numbers<[1], [0], [0], [1], [0, 0, 1, 1], [], []>} : vector<16x4xbf16>, vector<4x4xbf16>, vector<16x4xf32> -> vector<16x4xf32>
    %50 = arith.addf %44, %49 : vector<16x4xf32>
    %51 = vector.extract_strided_slice %2 {offsets = [2, 2, 0], sizes = [4, 4, 4], strides = [1, 1, 1]} : vector<6x6x4xbf16> to vector<4x4x4xbf16>
    %52 = vector.shape_cast %51 : vector<4x4x4xbf16> to vector<16x4xbf16>
    %c8 = arith.constant 8 : index
    %c0_29 = arith.constant 0 : index
    %c0_30 = arith.constant 0 : index
    %53 = vector.load %arg5[%c8, %c0_29, %c0_30] : memref<27x4x4xbf16, #tpu.memory_space<vmem>>, vector<1x4x4xbf16>
    %54 = vector.shape_cast %53 : vector<1x4x4xbf16> to vector<4x4xbf16>
    %cst_31 = arith.constant dense<0.000000e+00> : vector<16x4xf32>
    %55 = tpu.matmul %52, %54, %cst_31 {dimension_numbers = #tpu.dot_dimension_numbers<[1], [0], [0], [1], [0, 0, 1, 1], [], []>} : vector<16x4xbf16>, vector<4x4xbf16>, vector<16x4xf32> -> vector<16x4xf32>
    %56 = arith.addf %50, %55 : vector<16x4xf32>
    %c0_32 = arith.constant 0 : index
    %c0_33 = arith.constant 0 : index
    %c0_34 = arith.constant 0 : index
    %c0_35 = arith.constant 0 : index
    %c0_36 = arith.constant 0 : index
    %57 = vector.load %arg3[%c0_32, %c0_33, %c0_34, %c0_35, %c0_36] : memref<1x1x6x6x4xbf16, #tpu.memory_space<vmem>>, vector<1x1x6x6x4xbf16>
    %58 = vector.shape_cast %57 : vector<1x1x6x6x4xbf16> to vector<6x6x4xbf16>
    %59 = vector.extract_strided_slice %58 {offsets = [0, 0, 0], sizes = [4, 4, 4], strides = [1, 1, 1]} : vector<6x6x4xbf16> to vector<4x4x4xbf16>
    %60 = vector.shape_cast %59 : vector<4x4x4xbf16> to vector<16x4xbf16>
    %c9 = arith.constant 9 : index
    %c0_37 = arith.constant 0 : index
    %c0_38 = arith.constant 0 : index
    %61 = vector.load %arg5[%c9, %c0_37, %c0_38] : memref<27x4x4xbf16, #tpu.memory_space<vmem>>, vector<1x4x4xbf16>
    %62 = vector.shape_cast %61 : vector<1x4x4xbf16> to vector<4x4xbf16>
    %cst_39 = arith.constant dense<0.000000e+00> : vector<16x4xf32>
    %63 = tpu.matmul %60, %62, %cst_39 {dimension_numbers = #tpu.dot_dimension_numbers<[1], [0], [0], [1], [0, 0, 1, 1], [], []>} : vector<16x4xbf16>, vector<4x4xbf16>, vector<16x4xf32> -> vector<16x4xf32>
    %64 = arith.addf %56, %63 : vector<16x4xf32>
    %65 = vector.extract_strided_slice %58 {offsets = [0, 1, 0], sizes = [4, 4, 4], strides = [1, 1, 1]} : vector<6x6x4xbf16> to vector<4x4x4xbf16>
    %66 = vector.shape_cast %65 : vector<4x4x4xbf16> to vector<16x4xbf16>
    %c10 = arith.constant 10 : index
    %c0_40 = arith.constant 0 : index
    %c0_41 = arith.constant 0 : index
    %67 = vector.load %arg5[%c10, %c0_40, %c0_41] : memref<27x4x4xbf16, #tpu.memory_space<vmem>>, vector<1x4x4xbf16>
    %68 = vector.shape_cast %67 : vector<1x4x4xbf16> to vector<4x4xbf16>
    %cst_42 = arith.constant dense<0.000000e+00> : vector<16x4xf32>
    %69 = tpu.matmul %66, %68, %cst_42 {dimension_numbers = #tpu.dot_dimension_numbers<[1], [0], [0], [1], [0, 0, 1, 1], [], []>} : vector<16x4xbf16>, vector<4x4xbf16>, vector<16x4xf32> -> vector<16x4xf32>
    %70 = arith.addf %64, %69 : vector<16x4xf32>
    %71 = vector.extract_strided_slice %58 {offsets = [0, 2, 0], sizes = [4, 4, 4], strides = [1, 1, 1]} : vector<6x6x4xbf16> to vector<4x4x4xbf16>
    %72 = vector.shape_cast %71 : vector<4x4x4xbf16> to vector<16x4xbf16>
    %c11 = arith.constant 11 : index
    %c0_43 = arith.constant 0 : index
    %c0_44 = arith.constant 0 : index
    %73 = vector.load %arg5[%c11, %c0_43, %c0_44] : memref<27x4x4xbf16, #tpu.memory_space<vmem>>, vector<1x4x4xbf16>
    %74 = vector.shape_cast %73 : vector<1x4x4xbf16> to vector<4x4xbf16>
    %cst_45 = arith.constant dense<0.000000e+00> : vector<16x4xf32>
    %75 = tpu.matmul %72, %74, %cst_45 {dimension_numbers = #tpu.dot_dimension_numbers<[1], [0], [0], [1], [0, 0, 1, 1], [], []>} : vector<16x4xbf16>, vector<4x4xbf16>, vector<16x4xf32> -> vector<16x4xf32>
    %76 = arith.addf %70, %75 : vector<16x4xf32>
    %77 = vector.extract_strided_slice %58 {offsets = [1, 0, 0], sizes = [4, 4, 4], strides = [1, 1, 1]} : vector<6x6x4xbf16> to vector<4x4x4xbf16>
    %78 = vector.shape_cast %77 : vector<4x4x4xbf16> to vector<16x4xbf16>
    %c12 = arith.constant 12 : index
    %c0_46 = arith.constant 0 : index
    %c0_47 = arith.constant 0 : index
    %79 = vector.load %arg5[%c12, %c0_46, %c0_47] : memref<27x4x4xbf16, #tpu.memory_space<vmem>>, vector<1x4x4xbf16>
    %80 = vector.shape_cast %79 : vector<1x4x4xbf16> to vector<4x4xbf16>
    %cst_48 = arith.constant dense<0.000000e+00> : vector<16x4xf32>
    %81 = tpu.matmul %78, %80, %cst_48 {dimension_numbers = #tpu.dot_dimension_numbers<[1], [0], [0], [1], [0, 0, 1, 1], [], []>} : vector<16x4xbf16>, vector<4x4xbf16>, vector<16x4xf32> -> vector<16x4xf32>
    %82 = arith.addf %76, %81 : vector<16x4xf32>
    %83 = vector.extract_strided_slice %58 {offsets = [1, 1, 0], sizes = [4, 4, 4], strides = [1, 1, 1]} : vector<6x6x4xbf16> to vector<4x4x4xbf16>
    %84 = vector.shape_cast %83 : vector<4x4x4xbf16> to vector<16x4xbf16>
    %c13 = arith.constant 13 : index
    %c0_49 = arith.constant 0 : index
    %c0_50 = arith.constant 0 : index
    %85 = vector.load %arg5[%c13, %c0_49, %c0_50] : memref<27x4x4xbf16, #tpu.memory_space<vmem>>, vector<1x4x4xbf16>
    %86 = vector.shape_cast %85 : vector<1x4x4xbf16> to vector<4x4xbf16>
    %cst_51 = arith.constant dense<0.000000e+00> : vector<16x4xf32>
    %87 = tpu.matmul %84, %86, %cst_51 {dimension_numbers = #tpu.dot_dimension_numbers<[1], [0], [0], [1], [0, 0, 1, 1], [], []>} : vector<16x4xbf16>, vector<4x4xbf16>, vector<16x4xf32> -> vector<16x4xf32>
    %88 = arith.addf %82, %87 : vector<16x4xf32>
    %89 = vector.extract_strided_slice %58 {offsets = [1, 2, 0], sizes = [4, 4, 4], strides = [1, 1, 1]} : vector<6x6x4xbf16> to vector<4x4x4xbf16>
    %90 = vector.shape_cast %89 : vector<4x4x4xbf16> to vector<16x4xbf16>
    %c14 = arith.constant 14 : index
    %c0_52 = arith.constant 0 : index
    %c0_53 = arith.constant 0 : index
    %91 = vector.load %arg5[%c14, %c0_52, %c0_53] : memref<27x4x4xbf16, #tpu.memory_space<vmem>>, vector<1x4x4xbf16>
    %92 = vector.shape_cast %91 : vector<1x4x4xbf16> to vector<4x4xbf16>
    %cst_54 = arith.constant dense<0.000000e+00> : vector<16x4xf32>
    %93 = tpu.matmul %90, %92, %cst_54 {dimension_numbers = #tpu.dot_dimension_numbers<[1], [0], [0], [1], [0, 0, 1, 1], [], []>} : vector<16x4xbf16>, vector<4x4xbf16>, vector<16x4xf32> -> vector<16x4xf32>
    %94 = arith.addf %88, %93 : vector<16x4xf32>
    %95 = vector.extract_strided_slice %58 {offsets = [2, 0, 0], sizes = [4, 4, 4], strides = [1, 1, 1]} : vector<6x6x4xbf16> to vector<4x4x4xbf16>
    %96 = vector.shape_cast %95 : vector<4x4x4xbf16> to vector<16x4xbf16>
    %c15 = arith.constant 15 : index
    %c0_55 = arith.constant 0 : index
    %c0_56 = arith.constant 0 : index
    %97 = vector.load %arg5[%c15, %c0_55, %c0_56] : memref<27x4x4xbf16, #tpu.memory_space<vmem>>, vector<1x4x4xbf16>
    %98 = vector.shape_cast %97 : vector<1x4x4xbf16> to vector<4x4xbf16>
    %cst_57 = arith.constant dense<0.000000e+00> : vector<16x4xf32>
    %99 = tpu.matmul %96, %98, %cst_57 {dimension_numbers = #tpu.dot_dimension_numbers<[1], [0], [0], [1], [0, 0, 1, 1], [], []>} : vector<16x4xbf16>, vector<4x4xbf16>, vector<16x4xf32> -> vector<16x4xf32>
    %100 = arith.addf %94, %99 : vector<16x4xf32>
    %101 = vector.extract_strided_slice %58 {offsets = [2, 1, 0], sizes = [4, 4, 4], strides = [1, 1, 1]} : vector<6x6x4xbf16> to vector<4x4x4xbf16>
    %102 = vector.shape_cast %101 : vector<4x4x4xbf16> to vector<16x4xbf16>
    %c16 = arith.constant 16 : index
    %c0_58 = arith.constant 0 : index
    %c0_59 = arith.constant 0 : index
    %103 = vector.load %arg5[%c16, %c0_58, %c0_59] : memref<27x4x4xbf16, #tpu.memory_space<vmem>>, vector<1x4x4xbf16>
    %104 = vector.shape_cast %103 : vector<1x4x4xbf16> to vector<4x4xbf16>
    %cst_60 = arith.constant dense<0.000000e+00> : vector<16x4xf32>
    %105 = tpu.matmul %102, %104, %cst_60 {dimension_numbers = #tpu.dot_dimension_numbers<[1], [0], [0], [1], [0, 0, 1, 1], [], []>} : vector<16x4xbf16>, vector<4x4xbf16>, vector<16x4xf32> -> vector<16x4xf32>
    %106 = arith.addf %100, %105 : vector<16x4xf32>
    %107 = vector.extract_strided_slice %58 {offsets = [2, 2, 0], sizes = [4, 4, 4], strides = [1, 1, 1]} : vector<6x6x4xbf16> to vector<4x4x4xbf16>
    %108 = vector.shape_cast %107 : vector<4x4x4xbf16> to vector<16x4xbf16>
    %c17 = arith.constant 17 : index
    %c0_61 = arith.constant 0 : index
    %c0_62 = arith.constant 0 : index
    %109 = vector.load %arg5[%c17, %c0_61, %c0_62] : memref<27x4x4xbf16, #tpu.memory_space<vmem>>, vector<1x4x4xbf16>
    %110 = vector.shape_cast %109 : vector<1x4x4xbf16> to vector<4x4xbf16>
    %cst_63 = arith.constant dense<0.000000e+00> : vector<16x4xf32>
    %111 = tpu.matmul %108, %110, %cst_63 {dimension_numbers = #tpu.dot_dimension_numbers<[1], [0], [0], [1], [0, 0, 1, 1], [], []>} : vector<16x4xbf16>, vector<4x4xbf16>, vector<16x4xf32> -> vector<16x4xf32>
    %112 = arith.addf %106, %111 : vector<16x4xf32>
    %c0_64 = arith.constant 0 : index
    %c0_65 = arith.constant 0 : index
    %c0_66 = arith.constant 0 : index
    %c0_67 = arith.constant 0 : index
    %c0_68 = arith.constant 0 : index
    %113 = vector.load %arg4[%c0_64, %c0_65, %c0_66, %c0_67, %c0_68] : memref<1x1x6x6x4xbf16, #tpu.memory_space<vmem>>, vector<1x1x6x6x4xbf16>
    %114 = vector.shape_cast %113 : vector<1x1x6x6x4xbf16> to vector<6x6x4xbf16>
    %115 = vector.extract_strided_slice %114 {offsets = [0, 0, 0], sizes = [4, 4, 4], strides = [1, 1, 1]} : vector<6x6x4xbf16> to vector<4x4x4xbf16>
    %116 = vector.shape_cast %115 : vector<4x4x4xbf16> to vector<16x4xbf16>
    %c18 = arith.constant 18 : index
    %c0_69 = arith.constant 0 : index
    %c0_70 = arith.constant 0 : index
    %117 = vector.load %arg5[%c18, %c0_69, %c0_70] : memref<27x4x4xbf16, #tpu.memory_space<vmem>>, vector<1x4x4xbf16>
    %118 = vector.shape_cast %117 : vector<1x4x4xbf16> to vector<4x4xbf16>
    %cst_71 = arith.constant dense<0.000000e+00> : vector<16x4xf32>
    %119 = tpu.matmul %116, %118, %cst_71 {dimension_numbers = #tpu.dot_dimension_numbers<[1], [0], [0], [1], [0, 0, 1, 1], [], []>} : vector<16x4xbf16>, vector<4x4xbf16>, vector<16x4xf32> -> vector<16x4xf32>
    %120 = arith.addf %112, %119 : vector<16x4xf32>
    %121 = vector.extract_strided_slice %114 {offsets = [0, 1, 0], sizes = [4, 4, 4], strides = [1, 1, 1]} : vector<6x6x4xbf16> to vector<4x4x4xbf16>
    %122 = vector.shape_cast %121 : vector<4x4x4xbf16> to vector<16x4xbf16>
    %c19 = arith.constant 19 : index
    %c0_72 = arith.constant 0 : index
    %c0_73 = arith.constant 0 : index
    %123 = vector.load %arg5[%c19, %c0_72, %c0_73] : memref<27x4x4xbf16, #tpu.memory_space<vmem>>, vector<1x4x4xbf16>
    %124 = vector.shape_cast %123 : vector<1x4x4xbf16> to vector<4x4xbf16>
    %cst_74 = arith.constant dense<0.000000e+00> : vector<16x4xf32>
    %125 = tpu.matmul %122, %124, %cst_74 {dimension_numbers = #tpu.dot_dimension_numbers<[1], [0], [0], [1], [0, 0, 1, 1], [], []>} : vector<16x4xbf16>, vector<4x4xbf16>, vector<16x4xf32> -> vector<16x4xf32>
    %126 = arith.addf %120, %125 : vector<16x4xf32>
    %127 = vector.extract_strided_slice %114 {offsets = [0, 2, 0], sizes = [4, 4, 4], strides = [1, 1, 1]} : vector<6x6x4xbf16> to vector<4x4x4xbf16>
    %128 = vector.shape_cast %127 : vector<4x4x4xbf16> to vector<16x4xbf16>
    %c20 = arith.constant 20 : index
    %c0_75 = arith.constant 0 : index
    %c0_76 = arith.constant 0 : index
    %129 = vector.load %arg5[%c20, %c0_75, %c0_76] : memref<27x4x4xbf16, #tpu.memory_space<vmem>>, vector<1x4x4xbf16>
    %130 = vector.shape_cast %129 : vector<1x4x4xbf16> to vector<4x4xbf16>
    %cst_77 = arith.constant dense<0.000000e+00> : vector<16x4xf32>
    %131 = tpu.matmul %128, %130, %cst_77 {dimension_numbers = #tpu.dot_dimension_numbers<[1], [0], [0], [1], [0, 0, 1, 1], [], []>} : vector<16x4xbf16>, vector<4x4xbf16>, vector<16x4xf32> -> vector<16x4xf32>
    %132 = arith.addf %126, %131 : vector<16x4xf32>
    %133 = vector.extract_strided_slice %114 {offsets = [1, 0, 0], sizes = [4, 4, 4], strides = [1, 1, 1]} : vector<6x6x4xbf16> to vector<4x4x4xbf16>
    %134 = vector.shape_cast %133 : vector<4x4x4xbf16> to vector<16x4xbf16>
    %c21 = arith.constant 21 : index
    %c0_78 = arith.constant 0 : index
    %c0_79 = arith.constant 0 : index
    %135 = vector.load %arg5[%c21, %c0_78, %c0_79] : memref<27x4x4xbf16, #tpu.memory_space<vmem>>, vector<1x4x4xbf16>
    %136 = vector.shape_cast %135 : vector<1x4x4xbf16> to vector<4x4xbf16>
    %cst_80 = arith.constant dense<0.000000e+00> : vector<16x4xf32>
    %137 = tpu.matmul %134, %136, %cst_80 {dimension_numbers = #tpu.dot_dimension_numbers<[1], [0], [0], [1], [0, 0, 1, 1], [], []>} : vector<16x4xbf16>, vector<4x4xbf16>, vector<16x4xf32> -> vector<16x4xf32>
    %138 = arith.addf %132, %137 : vector<16x4xf32>
    %139 = vector.extract_strided_slice %114 {offsets = [1, 1, 0], sizes = [4, 4, 4], strides = [1, 1, 1]} : vector<6x6x4xbf16> to vector<4x4x4xbf16>
    %140 = vector.shape_cast %139 : vector<4x4x4xbf16> to vector<16x4xbf16>
    %c22 = arith.constant 22 : index
    %c0_81 = arith.constant 0 : index
    %c0_82 = arith.constant 0 : index
    %141 = vector.load %arg5[%c22, %c0_81, %c0_82] : memref<27x4x4xbf16, #tpu.memory_space<vmem>>, vector<1x4x4xbf16>
    %142 = vector.shape_cast %141 : vector<1x4x4xbf16> to vector<4x4xbf16>
    %cst_83 = arith.constant dense<0.000000e+00> : vector<16x4xf32>
    %143 = tpu.matmul %140, %142, %cst_83 {dimension_numbers = #tpu.dot_dimension_numbers<[1], [0], [0], [1], [0, 0, 1, 1], [], []>} : vector<16x4xbf16>, vector<4x4xbf16>, vector<16x4xf32> -> vector<16x4xf32>
    %144 = arith.addf %138, %143 : vector<16x4xf32>
    %145 = vector.extract_strided_slice %114 {offsets = [1, 2, 0], sizes = [4, 4, 4], strides = [1, 1, 1]} : vector<6x6x4xbf16> to vector<4x4x4xbf16>
    %146 = vector.shape_cast %145 : vector<4x4x4xbf16> to vector<16x4xbf16>
    %c23 = arith.constant 23 : index
    %c0_84 = arith.constant 0 : index
    %c0_85 = arith.constant 0 : index
    %147 = vector.load %arg5[%c23, %c0_84, %c0_85] : memref<27x4x4xbf16, #tpu.memory_space<vmem>>, vector<1x4x4xbf16>
    %148 = vector.shape_cast %147 : vector<1x4x4xbf16> to vector<4x4xbf16>
    %cst_86 = arith.constant dense<0.000000e+00> : vector<16x4xf32>
    %149 = tpu.matmul %146, %148, %cst_86 {dimension_numbers = #tpu.dot_dimension_numbers<[1], [0], [0], [1], [0, 0, 1, 1], [], []>} : vector<16x4xbf16>, vector<4x4xbf16>, vector<16x4xf32> -> vector<16x4xf32>
    %150 = arith.addf %144, %149 : vector<16x4xf32>
    %151 = vector.extract_strided_slice %114 {offsets = [2, 0, 0], sizes = [4, 4, 4], strides = [1, 1, 1]} : vector<6x6x4xbf16> to vector<4x4x4xbf16>
    %152 = vector.shape_cast %151 : vector<4x4x4xbf16> to vector<16x4xbf16>
    %c24 = arith.constant 24 : index
    %c0_87 = arith.constant 0 : index
    %c0_88 = arith.constant 0 : index
    %153 = vector.load %arg5[%c24, %c0_87, %c0_88] : memref<27x4x4xbf16, #tpu.memory_space<vmem>>, vector<1x4x4xbf16>
    %154 = vector.shape_cast %153 : vector<1x4x4xbf16> to vector<4x4xbf16>
    %cst_89 = arith.constant dense<0.000000e+00> : vector<16x4xf32>
    %155 = tpu.matmul %152, %154, %cst_89 {dimension_numbers = #tpu.dot_dimension_numbers<[1], [0], [0], [1], [0, 0, 1, 1], [], []>} : vector<16x4xbf16>, vector<4x4xbf16>, vector<16x4xf32> -> vector<16x4xf32>
    %156 = arith.addf %150, %155 : vector<16x4xf32>
    %157 = vector.extract_strided_slice %114 {offsets = [2, 1, 0], sizes = [4, 4, 4], strides = [1, 1, 1]} : vector<6x6x4xbf16> to vector<4x4x4xbf16>
    %158 = vector.shape_cast %157 : vector<4x4x4xbf16> to vector<16x4xbf16>
    %c25 = arith.constant 25 : index
    %c0_90 = arith.constant 0 : index
    %c0_91 = arith.constant 0 : index
    %159 = vector.load %arg5[%c25, %c0_90, %c0_91] : memref<27x4x4xbf16, #tpu.memory_space<vmem>>, vector<1x4x4xbf16>
    %160 = vector.shape_cast %159 : vector<1x4x4xbf16> to vector<4x4xbf16>
    %cst_92 = arith.constant dense<0.000000e+00> : vector<16x4xf32>
    %161 = tpu.matmul %158, %160, %cst_92 {dimension_numbers = #tpu.dot_dimension_numbers<[1], [0], [0], [1], [0, 0, 1, 1], [], []>} : vector<16x4xbf16>, vector<4x4xbf16>, vector<16x4xf32> -> vector<16x4xf32>
    %162 = arith.addf %156, %161 : vector<16x4xf32>
    %163 = vector.extract_strided_slice %114 {offsets = [2, 2, 0], sizes = [4, 4, 4], strides = [1, 1, 1]} : vector<6x6x4xbf16> to vector<4x4x4xbf16>
    %164 = vector.shape_cast %163 : vector<4x4x4xbf16> to vector<16x4xbf16>
    %c26 = arith.constant 26 : index
    %c0_93 = arith.constant 0 : index
    %c0_94 = arith.constant 0 : index
    %165 = vector.load %arg5[%c26, %c0_93, %c0_94] : memref<27x4x4xbf16, #tpu.memory_space<vmem>>, vector<1x4x4xbf16>
    %166 = vector.shape_cast %165 : vector<1x4x4xbf16> to vector<4x4xbf16>
    %cst_95 = arith.constant dense<0.000000e+00> : vector<16x4xf32>
    %167 = tpu.matmul %164, %166, %cst_95 {dimension_numbers = #tpu.dot_dimension_numbers<[1], [0], [0], [1], [0, 0, 1, 1], [], []>} : vector<16x4xbf16>, vector<4x4xbf16>, vector<16x4xf32> -> vector<16x4xf32>
    %168 = arith.addf %162, %167 : vector<16x4xf32>
    %c0_96 = arith.constant 0 : index
    %c0_97 = arith.constant 0 : index
    %169 = vector.load %arg6[%c0_96, %c0_97] : memref<1x4xf32, #tpu.memory_space<vmem>>, vector<1x4xf32>
    %170 = vector.broadcast %169 : vector<1x4xf32> to vector<16x4xf32>
    %171 = arith.mulf %168, %170 : vector<16x4xf32>
    %c0_98 = arith.constant 0 : index
    %c0_99 = arith.constant 0 : index
    %172 = vector.load %arg7[%c0_98, %c0_99] : memref<1x4xf32, #tpu.memory_space<vmem>>, vector<1x4xf32>
    %173 = vector.broadcast %172 : vector<1x4xf32> to vector<16x4xf32>
    %174 = arith.addf %171, %173 : vector<16x4xf32>
    %cst_100 = arith.constant 0.000000e+00 : f32
    %175 = vector.broadcast %cst_100 : f32 to vector<16x4xf32>
    %176 = arith.maximumf %174, %175 : vector<16x4xf32>
    %177 = vector.shape_cast %176 : vector<16x4xf32> to vector<4x4x4xf32>
    %178 = arith.truncf %177 : vector<4x4x4xf32> to vector<4x4x4xbf16>
    %c0_101 = arith.constant 0 : index
    %c0_102 = arith.constant 0 : index
    %c0_103 = arith.constant 0 : index
    %c0_104 = arith.constant 0 : index
    %c0_105 = arith.constant 0 : index
    %179 = vector.load %arg8[%c0_101, %c0_102, %c0_103, %c0_104, %c0_105] : memref<1x1x4x4x4xbf16, #tpu.memory_space<vmem>>, vector<1x1x4x4x4xbf16>
    %180 = vector.shape_cast %179 : vector<1x1x4x4x4xbf16> to vector<4x4x4xbf16>
    %181 = vector.shape_cast %178 : vector<4x4x4xbf16> to vector<1x1x4x4x4xbf16>
    tpu.vector_store %arg8[%c0_101, %c0_102, %c0_103, %c0_104, %c0_105], %181 {strides = array<i32>} : memref<1x1x4x4x4xbf16, #tpu.memory_space<vmem>>, vector<1x1x4x4x4xbf16>,
    return
  }
  func.func @transform_0(%arg0: i32, %arg1: i32) -> (i32, i32, i32, i32, i32) {
    %c0_i32 = arith.constant 0 : i32
    %0 = arith.addi %arg1, %c0_i32 : i32
    %c0_i32_0 = arith.constant 0 : i32
    %c0_i32_1 = arith.constant 0 : i32
    %c0_i32_2 = arith.constant 0 : i32
    %c0_i32_3 = arith.constant 0 : i32
    return %arg0, %0, %c0_i32_0, %c0_i32_1, %c0_i32_2 : i32, i32, i32, i32, i32
  }
  func.func @transform_1(%arg0: i32, %arg1: i32) -> (i32, i32, i32, i32, i32) {
    %c1_i32 = arith.constant 1 : i32
    %0 = arith.addi %arg1, %c1_i32 : i32
    %c0_i32 = arith.constant 0 : i32
    %c0_i32_0 = arith.constant 0 : i32
    %c0_i32_1 = arith.constant 0 : i32
    %c0_i32_2 = arith.constant 0 : i32
    return %arg0, %0, %c0_i32, %c0_i32_0, %c0_i32_1 : i32, i32, i32, i32, i32
  }
  func.func @transform_2(%arg0: i32, %arg1: i32) -> (i32, i32, i32, i32, i32) {
    %c2_i32 = arith.constant 2 : i32
    %0 = arith.addi %arg1, %c2_i32 : i32
    %c0_i32 = arith.constant 0 : i32
    %c0_i32_0 = arith.constant 0 : i32
    %c0_i32_1 = arith.constant 0 : i32
    %c0_i32_2 = arith.constant 0 : i32
    return %arg0, %0, %c0_i32, %c0_i32_0, %c0_i32_1 : i32, i32, i32, i32, i32
  }
  func.func @transform_3(%arg0: i32, %arg1: i32) -> (i32, i32, i32) {
    %c0_i32 = arith.constant 0 : i32
    %c0_i32_0 = arith.constant 0 : i32
    %c0_i32_1 = arith.constant 0 : i32
    %c0_i32_2 = arith.constant 0 : i32
    return %c0_i32, %c0_i32_0, %c0_i32_1 : i32, i32, i32
  }
  func.func @transform_4(%arg0: i32, %arg1: i32) -> (i32, i32) {
    %c0_i32 = arith.constant 0 : i32
    %c0_i32_0 = arith.constant 0 : i32
    %c0_i32_1 = arith.constant 0 : i32
    return %c0_i32, %c0_i32_0 : i32, i32
  }
  func.func @transform_5(%arg0: i32, %arg1: i32) -> (i32, i32) {
    %c0_i32 = arith.constant 0 : i32
    %c0_i32_0 = arith.constant 0 : i32
    %c0_i32_1 = arith.constant 0 : i32
    return %c0_i32, %c0_i32_0 : i32, i32
  }
  func.func @transform_6(%arg0: i32, %arg1: i32) -> (i32, i32, i32, i32, i32) {
    %c0_i32 = arith.constant 0 : i32
    %c0_i32_0 = arith.constant 0 : i32
    %c0_i32_1 = arith.constant 0 : i32
    %c0_i32_2 = arith.constant 0 : i32
    return %arg0, %arg1, %c0_i32, %c0_i32_0, %c0_i32_1 : i32, i32, i32, i32, i32
  }
}

module attributes {stable_mosaic.version = 11 : i64} {
  func.func @_fused_matmul_bn_res_relu_kernel(%arg0: i32, %arg1: memref<128x4xbf16, #tpu.memory_space<vmem>>, %arg2: memref<4x16xbf16, #tpu.memory_space<vmem>>, %arg3: memref<1x16xf32, #tpu.memory_space<vmem>>, %arg4: memref<1x16xf32, #tpu.memory_space<vmem>>, %arg5: memref<128x16xbf16, #tpu.memory_space<vmem>>, %arg6: memref<128x16xf32, #tpu.memory_space<vmem>>) attributes {dimension_semantics = [#tpu.dimension_semantics<parallel>], iteration_bounds = array<i64: 1>, scalar_prefetch = 0 : i64, scratch_operands = 0 : i64, tpu.core_type = #tpu.core_type<tc>, window_params = [{transform_indices = @transform_0, window_bounds = array<i64: 128, 4>}, {pipeline_mode = #tpu.pipeline_mode<synchronous>, transform_indices = @transform_1, window_bounds = array<i64: 4, 16>}, {pipeline_mode = #tpu.pipeline_mode<synchronous>, transform_indices = @transform_2, window_bounds = array<i64: 1, 16>}, {pipeline_mode = #tpu.pipeline_mode<synchronous>, transform_indices = @transform_3, window_bounds = array<i64: 1, 16>}, {transform_indices = @transform_4, window_bounds = array<i64: 128, 16>}, {transform_indices = @transform_5, window_bounds = array<i64: 128, 16>}]} {
    %c0 = arith.constant 0 : index
    %c0_0 = arith.constant 0 : index
    %0 = vector.load %arg1[%c0, %c0_0] : memref<128x4xbf16, #tpu.memory_space<vmem>>, vector<128x4xbf16>
    %c0_1 = arith.constant 0 : index
    %c0_2 = arith.constant 0 : index
    %1 = vector.load %arg2[%c0_1, %c0_2] : memref<4x16xbf16, #tpu.memory_space<vmem>>, vector<4x16xbf16>
    %cst = arith.constant dense<0.000000e+00> : vector<128x16xf32>
    %2 = tpu.matmul %0, %1, %cst {dimension_numbers = #tpu.dot_dimension_numbers<[1], [0], [0], [1], [0, 0, 1, 1], [], []>} : vector<128x4xbf16>, vector<4x16xbf16>, vector<128x16xf32> -> vector<128x16xf32>
    %c0_3 = arith.constant 0 : index
    %c0_4 = arith.constant 0 : index
    %3 = vector.load %arg3[%c0_3, %c0_4] : memref<1x16xf32, #tpu.memory_space<vmem>>, vector<1x16xf32>
    %4 = vector.broadcast %3 : vector<1x16xf32> to vector<128x16xf32>
    %5 = arith.mulf %2, %4 : vector<128x16xf32>
    %c0_5 = arith.constant 0 : index
    %c0_6 = arith.constant 0 : index
    %6 = vector.load %arg4[%c0_5, %c0_6] : memref<1x16xf32, #tpu.memory_space<vmem>>, vector<1x16xf32>
    %7 = vector.broadcast %6 : vector<1x16xf32> to vector<128x16xf32>
    %8 = arith.addf %5, %7 : vector<128x16xf32>
    %c0_7 = arith.constant 0 : index
    %c0_8 = arith.constant 0 : index
    %9 = vector.load %arg5[%c0_7, %c0_8] : memref<128x16xbf16, #tpu.memory_space<vmem>>, vector<128x16xbf16>
    %10 = arith.extf %9 : vector<128x16xbf16> to vector<128x16xf32>
    %11 = arith.addf %8, %10 : vector<128x16xf32>
    %cst_9 = arith.constant 0.000000e+00 : f32
    %12 = vector.broadcast %cst_9 : f32 to vector<128x16xf32>
    %13 = arith.maximumf %11, %12 : vector<128x16xf32>
    %c0_10 = arith.constant 0 : index
    %c0_11 = arith.constant 0 : index
    %14 = vector.load %arg6[%c0_10, %c0_11] : memref<128x16xf32, #tpu.memory_space<vmem>>, vector<128x16xf32>
    tpu.vector_store %arg6[%c0_10, %c0_11], %13 {strides = array<i32>} : memref<128x16xf32, #tpu.memory_space<vmem>>, vector<128x16xf32>,
    return
  }
  func.func @transform_0(%arg0: i32) -> (i32, i32) {
    %c0_i32 = arith.constant 0 : i32
    %c0_i32_0 = arith.constant 0 : i32
    return %arg0, %c0_i32 : i32, i32
  }
  func.func @transform_1(%arg0: i32) -> (i32, i32) {
    %c0_i32 = arith.constant 0 : i32
    %c0_i32_0 = arith.constant 0 : i32
    %c0_i32_1 = arith.constant 0 : i32
    return %c0_i32, %c0_i32_0 : i32, i32
  }
  func.func @transform_2(%arg0: i32) -> (i32, i32) {
    %c0_i32 = arith.constant 0 : i32
    %c0_i32_0 = arith.constant 0 : i32
    %c0_i32_1 = arith.constant 0 : i32
    return %c0_i32, %c0_i32_0 : i32, i32
  }
  func.func @transform_3(%arg0: i32) -> (i32, i32) {
    %c0_i32 = arith.constant 0 : i32
    %c0_i32_0 = arith.constant 0 : i32
    %c0_i32_1 = arith.constant 0 : i32
    return %c0_i32, %c0_i32_0 : i32, i32
  }
  func.func @transform_4(%arg0: i32) -> (i32, i32) {
    %c0_i32 = arith.constant 0 : i32
    %c0_i32_0 = arith.constant 0 : i32
    return %arg0, %c0_i32 : i32, i32
  }
  func.func @transform_5(%arg0: i32) -> (i32, i32) {
    %c0_i32 = arith.constant 0 : i32
    %c0_i32_0 = arith.constant 0 : i32
    return %arg0, %c0_i32 : i32, i32
  }
}

</mosaic_0001>

<llo_original>
// kernel: bottleneck3d_forward.3
$region0: #{bottleneck3d_forward.3}
  #allocation0 [shape = 'u32[]', space=smem, size = 0x4, offset = 0x4, fixed_abs, tag = 'smem constant byte address 0x4 - core index']
  #allocation1 [shape = 'u32[72,128]{1,0:T(1,128)}', space=vmem, size = 0x9000, scoped, tag = 'internal scratch']
  %s0 = inlined_call_operand.vmem [shape: bf16[128,16], index: 0, kind: input, shape index: {}]
  %s1 = inlined_call_operand.vmem [shape: bf16[16,4], index: 1, kind: input, shape index: {}]
  %s2 = inlined_call_operand.vmem [shape: f32[1,4], index: 2, kind: input, shape index: {}]
  %s3 = inlined_call_operand.vmem [shape: f32[1,4], index: 3, kind: input, shape index: {}]
  %s4 = inlined_call_operand.vmem [shape: bf16[128,4], index: 4, kind: output, shape index: {}]
  %s5 = sld [smem:[#allocation0]]
  $region26: #{bottleneck3d_forward.3} parent=0
    _
  %s7 = ssub.s32 1, %s5
  %s8 = scalar_select 0, %s7, %s5
  // Predicated region
  $region2: #{bottleneck3d_forward.3} parent=0 // pred_check
    _
  $region3: #{bottleneck3d_forward.3} parent=0 // pred_check_branch
    %10 = sbr.rel (0) target = $region5
  $region4: #{bottleneck3d_forward.3} parent=0 // pred_region
    _
  $region5: #{bottleneck3d_forward.3} parent=0 // pred_fallthru
    _
  // Predicated region
  $region6: #{bottleneck3d_forward.3} parent=0 // pred_check
    _
  $region7: #{bottleneck3d_forward.3} parent=0 // pred_check_branch
    %12 = sbr.rel (0) target = $region9
  $region8: #{bottleneck3d_forward.3} parent=0 // pred_region
    _
  $region9: #{bottleneck3d_forward.3} parent=0 // pred_fallthru
    _
  // Predicated region
  $region10: #{bottleneck3d_forward.3} parent=0 // pred_check
    _
  $region11: #{bottleneck3d_forward.3} parent=0 // pred_check_branch
    %14 = sbr.rel (0) target = $region13
  $region12: #{bottleneck3d_forward.3} parent=0 // pred_region
    _
  $region13: #{bottleneck3d_forward.3} parent=0 // pred_fallthru
    _
  // Predicated region
  $region14: #{bottleneck3d_forward.3} parent=0 // pred_check
    _
  $region15: #{bottleneck3d_forward.3} parent=0 // pred_check_branch
    %16 = sbr.rel (0) target = $region17
  $region16: #{bottleneck3d_forward.3} parent=0 // pred_region
    _
  $region17: #{bottleneck3d_forward.3} parent=0 // pred_fallthru
    _
  %v18 = vld [vmem:[%s0] sm:$0xf]
  %v19 = vld [vmem:[%s0 + $0x4] sm:$0xf]
  %v20 = vld [vmem:[%s0 + $0x8] sm:$0xf]
  %v21 = vld [vmem:[%s0 + $0xc] sm:$0xf]
  %v22 = vld [vmem:[%s0 + $0x10] sm:$0xf]
  %v23 = vld [vmem:[%s0 + $0x14] sm:$0xf]
  %v24 = vld [vmem:[%s0 + $0x18] sm:$0xf]
  %v25 = vld [vmem:[%s0 + $0x1c] sm:$0xf]
  %v26 = vld [vmem:[%s0 + $0x20] sm:$0xf]
  %v27 = vld [vmem:[%s0 + $0x24] sm:$0xf]
  %v28 = vld [vmem:[%s0 + $0x28] sm:$0xf]
  %v29 = vld [vmem:[%s0 + $0x2c] sm:$0xf]
  %v30 = vld [vmem:[%s0 + $0x30] sm:$0xf]
  %v31 = vld [vmem:[%s0 + $0x34] sm:$0xf]
  %v32 = vld [vmem:[%s0 + $0x38] sm:$0xf]
  %v33 = vld [vmem:[%s0 + $0x3c] sm:$0xf]
  %v34 = vld [vmem:[%s1] sm:$0xf]
  %v35 = vld [vmem:[%s1 + $0x4] sm:$0xf]
  %v52 = vunpack.c.l.b16 %v18
  %v53 = vunpack.c.l.b16 %v19
  %v54 = vunpack.c.l.b16 %v20
  %v55 = vunpack.c.l.b16 %v21
  %v56 = vunpack.c.l.b16 %v22
  %v57 = vunpack.c.l.b16 %v23
  %v58 = vunpack.c.l.b16 %v24
  %v59 = vunpack.c.l.b16 %v25
  %v60 = vunpack.c.l.b16 %v26
  %v61 = vunpack.c.l.b16 %v27
  %v62 = vunpack.c.l.b16 %v28
  %v63 = vunpack.c.l.b16 %v29
  %v64 = vunpack.c.l.b16 %v30
  %v65 = vunpack.c.l.b16 %v31
  %v66 = vunpack.c.l.b16 %v32
  %v67 = vunpack.c.l.b16 %v33
  %v68 = vpack.c.b16 %v53, %v52
  %v69 = vpack.c.b16 %v55, %v54
  %v70 = vpack.c.b16 %v57, %v56
  %v71 = vpack.c.b16 %v59, %v58
  %v72 = vpack.c.b16 %v61, %v60
  %v73 = vpack.c.b16 %v63, %v62
  %v74 = vpack.c.b16 %v65, %v64
  %v75 = vpack.c.b16 %v67, %v66
  %v78 = vunpack.c.l.b16 %v34
  %v79 = vunpack.c.l.b16 %v35
  %v80 = vpack.c.b16 %v79, %v78
  %vm82 = vcmask 130048
  %v84 = vsel %vm82, %v68, 0
  %v87 = vsel %vm82, %v69, 0
  %v90 = vsel %vm82, %v70, 0
  %v93 = vsel %vm82, %v71, 0
  %v96 = vsel %vm82, %v72, 0
  %v99 = vsel %vm82, %v73, 0
  %v102 = vsel %vm82, %v74, 0
  %v105 = vsel %vm82, %v75, 0
  %107 = vmatpush.bf16.msra.mxu0 0
  %108 = vmatpush.bf16.msra.mxu0 0
  %109 = vmatpush.bf16.msra.mxu0 0
  %110 = vmatpush.bf16.msra.mxu0 0
  %111 = vmatpush.bf16.msra.mxu0 0
  %112 = vmatpush.bf16.msra.mxu0 0
  %113 = vmatpush.bf16.msra.mxu0 0
  %114 = vmatpush.bf16.msra.mxu0 %v80
  %115 = vmatmul.bf16.gmra.mxu0 %v84
  %v116 = vpop.f32.mrf.mxu0
  %v117 = vadd.f32 0.0, %v116
  %v118 = vpop.f32.mrf.mxu0
  %v119 = vadd.f32 0.0, %v118
  %120 = vmatmul.bf16.gmra.mxu0 %v87
  %v121 = vpop.f32.mrf.mxu0
  %v122 = vadd.f32 0.0, %v121
  %v123 = vpop.f32.mrf.mxu0
  %v124 = vadd.f32 0.0, %v123
  %125 = vmatmul.bf16.gmra.mxu0 %v90
  %v126 = vpop.f32.mrf.mxu0
  %v127 = vadd.f32 0.0, %v126
  %v128 = vpop.f32.mrf.mxu0
  %v129 = vadd.f32 0.0, %v128
  %130 = vmatmul.bf16.gmra.mxu0 %v93
  %v131 = vpop.f32.mrf.mxu0
  %v132 = vadd.f32 0.0, %v131
  %v133 = vpop.f32.mrf.mxu0
  %v134 = vadd.f32 0.0, %v133
  %135 = vmatmul.bf16.gmra.mxu0 %v96
  %v136 = vpop.f32.mrf.mxu0
  %v137 = vadd.f32 0.0, %v136
  %v138 = vpop.f32.mrf.mxu0
  %v139 = vadd.f32 0.0, %v138
  %140 = vmatmul.bf16.gmra.mxu0 %v99
  %v141 = vpop.f32.mrf.mxu0
  %v142 = vadd.f32 0.0, %v141
  %v143 = vpop.f32.mrf.mxu0
  %v144 = vadd.f32 0.0, %v143
  %145 = vmatmul.bf16.gmra.mxu0 %v102
  %v146 = vpop.f32.mrf.mxu0
  %v147 = vadd.f32 0.0, %v146
  %v148 = vpop.f32.mrf.mxu0
  %v149 = vadd.f32 0.0, %v148
  %150 = vmatmul.bf16.gmra.mxu0 %v105
  %v151 = vpop.f32.mrf.mxu0
  %v152 = vadd.f32 0.0, %v151
  %v153 = vpop.f32.mrf.mxu0
  %v154 = vadd.f32 0.0, %v153
  %155 = vdwg.mxu0
  %v156 = vld [vmem:[%s2] sm:$0x1]
  %v158 = vperm.slane %v156, 0
  %v160 = vmul.f32 %v117, %v158
  %v161 = vmul.f32 %v119, %v158
  %v162 = vmul.f32 %v122, %v158
  %v163 = vmul.f32 %v124, %v158
  %v164 = vmul.f32 %v127, %v158
  %v165 = vmul.f32 %v129, %v158
  %v166 = vmul.f32 %v132, %v158
  %v167 = vmul.f32 %v134, %v158
  %v168 = vmul.f32 %v137, %v158
  %v169 = vmul.f32 %v139, %v158
  %v170 = vmul.f32 %v142, %v158
  %v171 = vmul.f32 %v144, %v158
  %v172 = vmul.f32 %v147, %v158
  %v173 = vmul.f32 %v149, %v158
  %v174 = vmul.f32 %v152, %v158
  %v175 = vmul.f32 %v154, %v158
  %v176 = vld [vmem:[%s3] sm:$0x1]
  %v178 = vperm.slane %v176, 0
  %v180 = vadd.f32 %v160, %v178
  %v181 = vadd.f32 %v161, %v178
  %v182 = vadd.f32 %v162, %v178
  %v183 = vadd.f32 %v163, %v178
  %v184 = vadd.f32 %v164, %v178
  %v185 = vadd.f32 %v165, %v178
  %v186 = vadd.f32 %v166, %v178
  %v187 = vadd.f32 %v167, %v178
  %v188 = vadd.f32 %v168, %v178
  %v189 = vadd.f32 %v169, %v178
  %v190 = vadd.f32 %v170, %v178
  %v191 = vadd.f32 %v171, %v178
  %v192 = vadd.f32 %v172, %v178
  %v193 = vadd.f32 %v173, %v178
  %v194 = vadd.f32 %v174, %v178
  %v195 = vadd.f32 %v175, %v178
  %v196 = vmax.f32 %v180, 0.0
  %v197 = vmax.f32 %v181, 0.0
  %v198 = vmax.f32 %v182, 0.0
  %v199 = vmax.f32 %v183, 0.0
  %v200 = vmax.f32 %v184, 0.0
  %v201 = vmax.f32 %v185, 0.0
  %v202 = vmax.f32 %v186, 0.0
  %v203 = vmax.f32 %v187, 0.0
  %v204 = vmax.f32 %v188, 0.0
  %v205 = vmax.f32 %v189, 0.0
  %v206 = vmax.f32 %v190, 0.0
  %v207 = vmax.f32 %v191, 0.0
  %v208 = vmax.f32 %v192, 0.0
  %v209 = vmax.f32 %v193, 0.0
  %v210 = vmax.f32 %v194, 0.0
  %v211 = vmax.f32 %v195, 0.0
  %v212 = vpack.c.bf16 %v196, %v196
  %v213 = vpack.c.bf16 %v197, %v197
  %v214 = vpack.c.bf16 %v198, %v198
  %v215 = vpack.c.bf16 %v199, %v199
  %v216 = vpack.c.bf16 %v200, %v200
  %v217 = vpack.c.bf16 %v201, %v201
  %v218 = vpack.c.bf16 %v202, %v202
  %v219 = vpack.c.bf16 %v203, %v203
  %v220 = vpack.c.bf16 %v204, %v204
  %v221 = vpack.c.bf16 %v205, %v205
  %v222 = vpack.c.bf16 %v206, %v206
  %v223 = vpack.c.bf16 %v207, %v207
  %v224 = vpack.c.bf16 %v208, %v208
  %v225 = vpack.c.bf16 %v209, %v209
  %v226 = vpack.c.bf16 %v210, %v210
  %v227 = vpack.c.bf16 %v211, %v211
  %vm228 = vcmask 27648
  %229 = vst.msk [vmem:[%s4] sm:$0xf] %vm228, %v212
  %230 = vst.msk [vmem:[%s4 + $0x4] sm:$0xf] %vm228, %v213
  %231 = vst.msk [vmem:[%s4 + $0x8] sm:$0xf] %vm228, %v214
  %232 = vst.msk [vmem:[%s4 + $0xc] sm:$0xf] %vm228, %v215
  %233 = vst.msk [vmem:[%s4 + $0x10] sm:$0xf] %vm228, %v216
  %234 = vst.msk [vmem:[%s4 + $0x14] sm:$0xf] %vm228, %v217
  %235 = vst.msk [vmem:[%s4 + $0x18] sm:$0xf] %vm228, %v218
  %236 = vst.msk [vmem:[%s4 + $0x1c] sm:$0xf] %vm228, %v219
  %237 = vst.msk [vmem:[%s4 + $0x20] sm:$0xf] %vm228, %v220
  %238 = vst.msk [vmem:[%s4 + $0x24] sm:$0xf] %vm228, %v221
  %239 = vst.msk [vmem:[%s4 + $0x28] sm:$0xf] %vm228, %v222
  %240 = vst.msk [vmem:[%s4 + $0x2c] sm:$0xf] %vm228, %v223
  %241 = vst.msk [vmem:[%s4 + $0x30] sm:$0xf] %vm228, %v224
  %242 = vst.msk [vmem:[%s4 + $0x34] sm:$0xf] %vm228, %v225
  %243 = vst.msk [vmem:[%s4 + $0x38] sm:$0xf] %vm228, %v226
  %244 = vst.msk [vmem:[%s4 + $0x3c] sm:$0xf] %vm228, %v227
  // Predicated region
  $region18: #{bottleneck3d_forward.3} parent=0 // pred_check
    _
  $region19: #{bottleneck3d_forward.3} parent=0 // pred_check_branch
    %246 = sbr.rel (0) target = $region21
  $region20: #{bottleneck3d_forward.3} parent=0 // pred_region
    _
  $region21: #{bottleneck3d_forward.3} parent=0 // pred_fallthru
    _
  // Predicated region
  $region22: #{bottleneck3d_forward.3} parent=0 // pred_check
    _
  $region23: #{bottleneck3d_forward.3} parent=0 // pred_check_branch
    %248 = sbr.rel (0) target = $region25
  $region24: #{bottleneck3d_forward.3} parent=0 // pred_region
    _
  $region25: #{bottleneck3d_forward.3} parent=0 // pred_fallthru
    _

// kernel: bottleneck3d_forward.5
$region0: #{bottleneck3d_forward.5}
  #allocation0 [shape = 'u32[]', space=smem, size = 0x4, offset = 0x4, fixed_abs, tag = 'smem constant byte address 0x4 - core index']
  #allocation1 [shape = 'u32[72,128]{1,0:T(1,128)}', space=vmem, size = 0x9000, scoped, tag = 'internal scratch']
  %s0 = inlined_call_operand.vmem [shape: bf16[128,4], index: 0, kind: input, shape index: {}]
  %s1 = inlined_call_operand.vmem [shape: bf16[4,16], index: 1, kind: input, shape index: {}]
  %s2 = inlined_call_operand.vmem [shape: f32[1,16], index: 2, kind: input, shape index: {}]
  %s3 = inlined_call_operand.vmem [shape: f32[1,16], index: 3, kind: input, shape index: {}]
  %s4 = inlined_call_operand.vmem [shape: bf16[128,16], index: 4, kind: input, shape index: {}]
  %s5 = inlined_call_operand.hbm [shape: f32[128,16], index: 5, kind: output, shape index: {}]
  %s6 = sld [smem:[#allocation0]]
  $region30: #{bottleneck3d_forward.5} parent=0
    _
  %s8 = ssub.s32 1, %s6
  %s9 = scalar_select 0, %s8, %s6
  $region1: #{bottleneck3d_forward.5} parent=0
    #allocation2 [shape = 'u8[65536]{0}', space=vmem, size = 0x10000, scoped, tag = 'output window, operand 0, single buffered']
    #allocation3 [shape = 's32[1]{0}', space=sflag, size = 0x4, scoped, tag = 'scoped memory for bottleneck3d_forward.5']
    %10 = vsyncpa [#allocation3], 0
    // Predicated region
    $region2: #{bottleneck3d_forward.5} parent=1 // pred_check
      _
    $region3: #{bottleneck3d_forward.5} parent=1 // pred_check_branch
      %12 = sbr.rel (0) target = $region5
    $region4: #{bottleneck3d_forward.5} parent=1 // pred_region
      _
    $region5: #{bottleneck3d_forward.5} parent=1 // pred_fallthru
      _
    // Predicated region
    $region6: #{bottleneck3d_forward.5} parent=1 // pred_check
      _
    $region7: #{bottleneck3d_forward.5} parent=1 // pred_check_branch
      %14 = sbr.rel (0) target = $region9
    $region8: #{bottleneck3d_forward.5} parent=1 // pred_region
      _
    $region9: #{bottleneck3d_forward.5} parent=1 // pred_fallthru
      _
    // Predicated region
    $region10: #{bottleneck3d_forward.5} parent=1 // pred_check
      _
    $region11: #{bottleneck3d_forward.5} parent=1 // pred_check_branch
      %16 = sbr.rel (0) target = $region13
    $region12: #{bottleneck3d_forward.5} parent=1 // pred_region
      _
    $region13: #{bottleneck3d_forward.5} parent=1 // pred_fallthru
      _
    // Predicated region
    $region14: #{bottleneck3d_forward.5} parent=1 // pred_check
      _
    $region15: #{bottleneck3d_forward.5} parent=1 // pred_check_branch
      %18 = sbr.rel (0) target = $region17
    $region16: #{bottleneck3d_forward.5} parent=1 // pred_region
      _
    $region17: #{bottleneck3d_forward.5} parent=1 // pred_fallthru
      _
    // Predicated region
    $region18: #{bottleneck3d_forward.5} parent=1 // pred_check
      _
    $region19: #{bottleneck3d_forward.5} parent=1 // pred_check_branch
      %20 = sbr.rel (0) target = $region21
    $region20: #{bottleneck3d_forward.5} parent=1 // pred_region
      _
    $region21: #{bottleneck3d_forward.5} parent=1 // pred_fallthru
      _
    %v22 = vld [vmem:[%s0] sm:$0xf]
    %v23 = vld [vmem:[%s0 + $0x4] sm:$0xf]
    %v24 = vld [vmem:[%s0 + $0x8] sm:$0xf]
    %v25 = vld [vmem:[%s0 + $0xc] sm:$0xf]
    %v26 = vld [vmem:[%s0 + $0x10] sm:$0xf]
    %v27 = vld [vmem:[%s0 + $0x14] sm:$0xf]
    %v28 = vld [vmem:[%s0 + $0x18] sm:$0xf]
    %v29 = vld [vmem:[%s0 + $0x1c] sm:$0xf]
    %v30 = vld [vmem:[%s0 + $0x20] sm:$0xf]
    %v31 = vld [vmem:[%s0 + $0x24] sm:$0xf]
    %v32 = vld [vmem:[%s0 + $0x28] sm:$0xf]
    %v33 = vld [vmem:[%s0 + $0x2c] sm:$0xf]
    %v34 = vld [vmem:[%s0 + $0x30] sm:$0xf]
    %v35 = vld [vmem:[%s0 + $0x34] sm:$0xf]
    %v36 = vld [vmem:[%s0 + $0x38] sm:$0xf]
    %v37 = vld [vmem:[%s0 + $0x3c] sm:$0xf]
    %v38 = vld [vmem:[%s1] sm:$0x3]
    %v55 = vunpack.c.l.b16 %v22
    %v56 = vunpack.c.l.b16 %v23
    %v57 = vunpack.c.l.b16 %v24
    %v58 = vunpack.c.l.b16 %v25
    %v59 = vunpack.c.l.b16 %v26
    %v60 = vunpack.c.l.b16 %v27
    %v61 = vunpack.c.l.b16 %v28
    %v62 = vunpack.c.l.b16 %v29
    %v63 = vunpack.c.l.b16 %v30
    %v64 = vunpack.c.l.b16 %v31
    %v65 = vunpack.c.l.b16 %v32
    %v66 = vunpack.c.l.b16 %v33
    %v67 = vunpack.c.l.b16 %v34
    %v68 = vunpack.c.l.b16 %v35
    %v69 = vunpack.c.l.b16 %v36
    %v70 = vunpack.c.l.b16 %v37
    %v71 = vpack.c.b16 %v56, %v55
    %v72 = vpack.c.b16 %v58, %v57
    %v73 = vpack.c.b16 %v60, %v59
    %v74 = vpack.c.b16 %v62, %v61
    %v75 = vpack.c.b16 %v64, %v63
    %v76 = vpack.c.b16 %v66, %v65
    %v77 = vpack.c.b16 %v68, %v67
    %v78 = vpack.c.b16 %v70, %v69
    %vm79 = vcmask 31744
    %v81 = vsel %vm79, %v71, 0
    %v84 = vsel %vm79, %v72, 0
    %v87 = vsel %vm79, %v73, 0
    %v90 = vsel %vm79, %v74, 0
    %v93 = vsel %vm79, %v75, 0
    %v96 = vsel %vm79, %v76, 0
    %v99 = vsel %vm79, %v77, 0
    %v102 = vsel %vm79, %v78, 0
    %vm104 = vcmask 1041408
    %v106 = vsel %vm104, %v38, 0
    %108 = vmatpush.bf16.msra.mxu0 0
    %109 = vmatpush.bf16.msra.mxu0 0
    %110 = vmatpush.bf16.msra.mxu0 0
    %111 = vmatpush.bf16.msra.mxu0 0
    %112 = vmatpush.bf16.msra.mxu0 0
    %113 = vmatpush.bf16.msra.mxu0 0
    %114 = vmatpush.bf16.msra.mxu0 0
    %115 = vmatpush.bf16.msra.mxu0 %v106
    %116 = vmatmul.bf16.gmra.mxu0 %v81
    %v117 = vpop.f32.mrf.mxu0
    %v118 = vadd.f32 0.0, %v117
    %v119 = vpop.f32.mrf.mxu0
    %v120 = vadd.f32 0.0, %v119
    %121 = vmatmul.bf16.gmra.mxu0 %v84
    %v122 = vpop.f32.mrf.mxu0
    %v123 = vadd.f32 0.0, %v122
    %v124 = vpop.f32.mrf.mxu0
    %v125 = vadd.f32 0.0, %v124
    %126 = vmatmul.bf16.gmra.mxu0 %v87
    %v127 = vpop.f32.mrf.mxu0
    %v128 = vadd.f32 0.0, %v127
    %v129 = vpop.f32.mrf.mxu0
    %v130 = vadd.f32 0.0, %v129
    %131 = vmatmul.bf16.gmra.mxu0 %v90
    %v132 = vpop.f32.mrf.mxu0
    %v133 = vadd.f32 0.0, %v132
    %v134 = vpop.f32.mrf.mxu0
    %v135 = vadd.f32 0.0, %v134
    %136 = vmatmul.bf16.gmra.mxu0 %v93
    %v137 = vpop.f32.mrf.mxu0
    %v138 = vadd.f32 0.0, %v137
    %v139 = vpop.f32.mrf.mxu0
    %v140 = vadd.f32 0.0, %v139
    %141 = vmatmul.bf16.gmra.mxu0 %v96
    %v142 = vpop.f32.mrf.mxu0
    %v143 = vadd.f32 0.0, %v142
    %v144 = vpop.f32.mrf.mxu0
    %v145 = vadd.f32 0.0, %v144
    %146 = vmatmul.bf16.gmra.mxu0 %v99
    %v147 = vpop.f32.mrf.mxu0
    %v148 = vadd.f32 0.0, %v147
    %v149 = vpop.f32.mrf.mxu0
    %v150 = vadd.f32 0.0, %v149
    %151 = vmatmul.bf16.gmra.mxu0 %v102
    %v152 = vpop.f32.mrf.mxu0
    %v153 = vadd.f32 0.0, %v152
    %v154 = vpop.f32.mrf.mxu0
    %v155 = vadd.f32 0.0, %v154
    %156 = vdwg.mxu0
    %v157 = vld [vmem:[%s2] sm:$0x1]
    %v159 = vperm.slane %v157, 0
    %v161 = vmul.f32 %v118, %v159
    %v162 = vmul.f32 %v120, %v159
    %v163 = vmul.f32 %v123, %v159
    %v164 = vmul.f32 %v125, %v159
    %v165 = vmul.f32 %v128, %v159
    %v166 = vmul.f32 %v130, %v159
    %v167 = vmul.f32 %v133, %v159
    %v168 = vmul.f32 %v135, %v159
    %v169 = vmul.f32 %v138, %v159
    %v170 = vmul.f32 %v140, %v159
    %v171 = vmul.f32 %v143, %v159
    %v172 = vmul.f32 %v145, %v159
    %v173 = vmul.f32 %v148, %v159
    %v174 = vmul.f32 %v150, %v159
    %v175 = vmul.f32 %v153, %v159
    %v176 = vmul.f32 %v155, %v159
    %v177 = vld [vmem:[%s3] sm:$0x1]
    %v179 = vperm.slane %v177, 0
    %v181 = vadd.f32 %v161, %v179
    %v182 = vadd.f32 %v162, %v179
    %v183 = vadd.f32 %v163, %v179
    %v184 = vadd.f32 %v164, %v179
    %v185 = vadd.f32 %v165, %v179
    %v186 = vadd.f32 %v166, %v179
    %v187 = vadd.f32 %v167, %v179
    %v188 = vadd.f32 %v168, %v179
    %v189 = vadd.f32 %v169, %v179
    %v190 = vadd.f32 %v170, %v179
    %v191 = vadd.f32 %v171, %v179
    %v192 = vadd.f32 %v172, %v179
    %v193 = vadd.f32 %v173, %v179
    %v194 = vadd.f32 %v174, %v179
    %v195 = vadd.f32 %v175, %v179
    %v196 = vadd.f32 %v176, %v179
    %v197 = vld [vmem:[%s4] sm:$0xf]
    %v198 = vld [vmem:[%s4 + $0x4] sm:$0xf]
    %v199 = vld [vmem:[%s4 + $0x8] sm:$0xf]
    %v200 = vld [vmem:[%s4 + $0xc] sm:$0xf]
    %v201 = vld [vmem:[%s4 + $0x10] sm:$0xf]
    %v202 = vld [vmem:[%s4 + $0x14] sm:$0xf]
    %v203 = vld [vmem:[%s4 + $0x18] sm:$0xf]
    %v204 = vld [vmem:[%s4 + $0x1c] sm:$0xf]
    %v205 = vld [vmem:[%s4 + $0x20] sm:$0xf]
    %v206 = vld [vmem:[%s4 + $0x24] sm:$0xf]
    %v207 = vld [vmem:[%s4 + $0x28] sm:$0xf]
    %v208 = vld [vmem:[%s4 + $0x2c] sm:$0xf]
    %v209 = vld [vmem:[%s4 + $0x30] sm:$0xf]
    %v210 = vld [vmem:[%s4 + $0x34] sm:$0xf]
    %v211 = vld [vmem:[%s4 + $0x38] sm:$0xf]
    %v212 = vld [vmem:[%s4 + $0x3c] sm:$0xf]
    %v213 = vunpack.c.l.bf16 %v197
    %v214 = vunpack.c.l.bf16 %v198
    %v215 = vunpack.c.l.bf16 %v199
    %v216 = vunpack.c.l.bf16 %v200
    %v217 = vunpack.c.l.bf16 %v201
    %v218 = vunpack.c.l.bf16 %v202
    %v219 = vunpack.c.l.bf16 %v203
    %v220 = vunpack.c.l.bf16 %v204
    %v221 = vunpack.c.l.bf16 %v205
    %v222 = vunpack.c.l.bf16 %v206
    %v223 = vunpack.c.l.bf16 %v207
    %v224 = vunpack.c.l.bf16 %v208
    %v225 = vunpack.c.l.bf16 %v209
    %v226 = vunpack.c.l.bf16 %v210
    %v227 = vunpack.c.l.bf16 %v211
    %v228 = vunpack.c.l.bf16 %v212
    %v229 = vadd.f32 %v181, %v213
    %v230 = vadd.f32 %v182, %v214
    %v231 = vadd.f32 %v183, %v215
    %v232 = vadd.f32 %v184, %v216
    %v233 = vadd.f32 %v185, %v217
    %v234 = vadd.f32 %v186, %v218
    %v235 = vadd.f32 %v187, %v219
    %v236 = vadd.f32 %v188, %v220
    %v237 = vadd.f32 %v189, %v221
    %v238 = vadd.f32 %v190, %v222
    %v239 = vadd.f32 %v191, %v223
    %v240 = vadd.f32 %v192, %v224
    %v241 = vadd.f32 %v193, %v225
    %v242 = vadd.f32 %v194, %v226
    %v243 = vadd.f32 %v195, %v227
    %v244 = vadd.f32 %v196, %v228
    %v245 = vmax.f32 %v229, 0.0
    %v246 = vmax.f32 %v230, 0.0
    %v247 = vmax.f32 %v231, 0.0
    %v248 = vmax.f32 %v232, 0.0
    %v249 = vmax.f32 %v233, 0.0
    %v250 = vmax.f32 %v234, 0.0
    %v251 = vmax.f32 %v235, 0.0
    %v252 = vmax.f32 %v236, 0.0
    %v253 = vmax.f32 %v237, 0.0
    %v254 = vmax.f32 %v238, 0.0
    %v255 = vmax.f32 %v239, 0.0
    %v256 = vmax.f32 %v240, 0.0
    %v257 = vmax.f32 %v241, 0.0
    %v258 = vmax.f32 %v242, 0.0
    %v259 = vmax.f32 %v243, 0.0
    %v260 = vmax.f32 %v244, 0.0
    %vm261 = vcmask 130048
    %262 = vst.msk [vmem:[#allocation2] sm:$0xff] %vm261, %v245
    %263 = vst.msk [vmem:[#allocation2 + $0x8] sm:$0xff] %vm261, %v246
    %264 = vst.msk [vmem:[#allocation2 + $0x10] sm:$0xff] %vm261, %v247
    %265 = vst.msk [vmem:[#allocation2 + $0x18] sm:$0xff] %vm261, %v248
    %266 = vst.msk [vmem:[#allocation2 + $0x20] sm:$0xff] %vm261, %v249
    %267 = vst.msk [vmem:[#allocation2 + $0x28] sm:$0xff] %vm261, %v250
    %268 = vst.msk [vmem:[#allocation2 + $0x30] sm:$0xff] %vm261, %v251
    %269 = vst.msk [vmem:[#allocation2 + $0x38] sm:$0xff] %vm261, %v252
    %270 = vst.msk [vmem:[#allocation2 + $0x40] sm:$0xff] %vm261, %v253
    %271 = vst.msk [vmem:[#allocation2 + $0x48] sm:$0xff] %vm261, %v254
    %272 = vst.msk [vmem:[#allocation2 + $0x50] sm:$0xff] %vm261, %v255
    %273 = vst.msk [vmem:[#allocation2 + $0x58] sm:$0xff] %vm261, %v256
    %274 = vst.msk [vmem:[#allocation2 + $0x60] sm:$0xff] %vm261, %v257
    %275 = vst.msk [vmem:[#allocation2 + $0x68] sm:$0xff] %vm261, %v258
    %276 = vst.msk [vmem:[#allocation2 + $0x70] sm:$0xff] %vm261, %v259
    %277 = vst.msk [vmem:[#allocation2 + $0x78] sm:$0xff] %vm261, %v260
    // Predicated region
    $region22: #{bottleneck3d_forward.5} parent=1 // pred_check
      _
    $region23: #{bottleneck3d_forward.5} parent=1 // pred_check_branch
      %279 = sbr.rel (0) target = $region25
    $region24: #{bottleneck3d_forward.5} parent=1 // pred_region
      %281 = vsyncadd [#allocation3], 0
      %s282 = sshll.u32 [#allocation2], 4
      %s283 = int_to_ptr.vmem [resolvable:$true] %s282
      %s284 = sshll.u32 %s5, 4
      %s285 = int_to_ptr.hbm [resolvable:$true] %s284
      %290 = dma.vmem_to_hbm [thread:$0]  %s283, 2048, %s285, [#allocation3], 128, 128, 8
    $region25: #{bottleneck3d_forward.5} parent=1 // pred_fallthru
      _
    // Predicated region
    $region26: #{bottleneck3d_forward.5} parent=1 // pred_check
      _
    $region27: #{bottleneck3d_forward.5} parent=1 // pred_check_branch
      %292 = sbr.rel (0) target = $region29
    $region28: #{bottleneck3d_forward.5} parent=1 // pred_region
      %294 = dma.done [#allocation3], 2048
    $region29: #{bottleneck3d_forward.5} parent=1 // pred_fallthru
      _
    %295 = vsyncpa [#allocation3], 1

// kernel: bottleneck3d_forward.4
$region0: #{bottleneck3d_forward.4}
  #allocation0 [shape = 'u32[]', space=smem, size = 0x4, offset = 0x4, fixed_abs, tag = 'smem constant byte address 0x4 - core index']
  #allocation1 [shape = 'u32[72,128]{1,0:T(1,128)}', space=vmem, size = 0x9000, scoped, tag = 'internal scratch']
  %s0 = inlined_call_operand.vmem [shape: bf16[2,6,6,6,4], index: 0, kind: input, shape index: {}, may-alias: {0,1,2}]
  %s1 = inlined_call_operand.vmem [shape: bf16[2,6,6,6,4], index: 1, kind: input, shape index: {}, may-alias: {0,1,2}]
  %s2 = inlined_call_operand.vmem [shape: bf16[2,6,6,6,4], index: 2, kind: input, shape index: {}, may-alias: {0,1,2}]
  %s3 = inlined_call_operand.vmem [shape: bf16[27,4,4], index: 3, kind: input, shape index: {}]
  %s4 = inlined_call_operand.vmem [shape: f32[1,4], index: 4, kind: input, shape index: {}]
  %s5 = inlined_call_operand.vmem [shape: f32[1,4], index: 5, kind: input, shape index: {}]
  %s6 = inlined_call_operand.vmem [shape: bf16[2,4,4,4,4], index: 6, kind: output, shape index: {}]
  %s7 = sld [smem:[#allocation0]]
  $region57: #{bottleneck3d_forward.4} parent=0
    _
  %s9 = ssub.s32 1, %s7
  %s10 = scalar_select 0, %s9, %s7
  loop: start=0, step=1, limit=10
  $region2: #{bottleneck3d_forward.4} parent=0 // loop_pre_header
    _
  $region3: #{bottleneck3d_forward.4} parent=0 // loop_header
    %s12 = sphi 0, %s16
    %p13 = scmp.ge.s32.totalorder %s12, 10
    %s19 = sphi 0, %s31
    %s20 = sphi 0, %s27
    %s21 = sphi 0, %s19
    %s22 = sphi 0, %s20
    %s23 = sphi 0, %s21
    %s24 = sphi 0, %s22
    %s36 = sphi 0, %s38
    %s39 = sphi 0, %s36
    %s40 = sphi 0, %s39
    %s56 = sphi 0, %s40
    %s66 = sphi 0, %s68
    %s69 = sphi 0, %s66
    %s70 = sphi 0, %s69
    %s86 = sphi 0, %s70
    %s96 = sphi 0, %s98
    %s99 = sphi 0, %s96
    %s100 = sphi 0, %s99
    %s116 = sphi 0, %s100
    %s120 = sphi 0, %s120
    %s122 = sphi 0, %s120
    %s123 = sphi 0, %s122
    %s137 = sphi 0, %s123
    %s141 = sphi 0, %s141
    %s143 = sphi 0, %s141
    %s144 = sphi 0, %s143
    %s158 = sphi 0, %s144
    %s162 = sphi 0, %s162
    %s164 = sphi 0, %s162
    %s165 = sphi 0, %s164
    %s179 = sphi 0, %s165
    %s187 = sphi 0, %s189
    %s190 = sphi 0, %s187
    %s191 = sphi 0, %s190
    %s207 = sphi 0, %s191
  $region4: #{bottleneck3d_forward.4} parent=0 // loop_header_branch
    %15 = sbr.rel (%p13) target = $region8
  $region5: #{bottleneck3d_forward.4} parent=0 // loop_body
    %s17 = ssub.s32 %s12, 1
    %s18 = ssub.s32 %s12, 2
    %s25 = sadd.s32 1, %s20
    %p26 = scmp.ge.s32.totalorder %s25, 4
    %s27 = scalar_select %p26, 0, %s25
    %s28 = sadd.s32 1, %s19
    %s29 = scalar_select %p26, %s28, %s19
    %p30 = scmp.ge.s32.totalorder %s29, 2
    %s31 = scalar_select %p30, 0, %s29
    %s32 = ssub.s32 %s19, %s31
    %s33 = ssub.s32 %s20, %s27
    %s34 = sor.u32 %s32, %s33
    %p35 = scmp.eq.s32.totalorder %s34, 0
    %s37 = sadd.s32 %s36, 1
    %s38 = scalar_select %p35, %s36, %s37
    %p41 = pneg %p35
    %p42 = scmp.eq.s32.totalorder %s12, 7
    %p43 = por %p41, %p42
    %p44 = scmp.ne.s32.totalorder %s36, %s39
    %p45 = scmp.eq.s32.totalorder %s12, 0
    %p46 = por %p44, %p45
    %p47 = scmp.ne.s32.totalorder %s36, %s39
    %p48 = scmp.eq.s32.totalorder %s17, 7
    %p49 = por %p47, %p48
    %p50 = scmp.ne.s32.totalorder %s39, %s40
    %p51 = scmp.eq.s32.totalorder %s17, 0
    %p52 = por %p50, %p51
    %p53 = scmp.ne.s32.totalorder %s39, %s40
    %p54 = scmp.eq.s32.totalorder %s18, 7
    %p55 = por %p53, %p54
    %p57 = scmp.ne.s32.totalorder %s40, %s56
    %p58 = scmp.eq.s32.totalorder %s18, 0
    %p59 = por %p57, %p58
    %s60 = sadd.s32 %s20, 1
    %s61 = sadd.s32 %s27, 1
    %s62 = ssub.s32 %s19, %s31
    %s63 = ssub.s32 %s60, %s61
    %s64 = sor.u32 %s62, %s63
    %p65 = scmp.eq.s32.totalorder %s64, 0
    %s67 = sadd.s32 %s66, 1
    %s68 = scalar_select %p65, %s66, %s67
    %p71 = pneg %p65
    %p72 = scmp.eq.s32.totalorder %s12, 7
    %p73 = por %p71, %p72
    %p74 = scmp.ne.s32.totalorder %s66, %s69
    %p75 = scmp.eq.s32.totalorder %s12, 0
    %p76 = por %p74, %p75
    %p77 = scmp.ne.s32.totalorder %s66, %s69
    %p78 = scmp.eq.s32.totalorder %s17, 7
    %p79 = por %p77, %p78
    %p80 = scmp.ne.s32.totalorder %s69, %s70
    %p81 = scmp.eq.s32.totalorder %s17, 0
    %p82 = por %p80, %p81
    %p83 = scmp.ne.s32.totalorder %s69, %s70
    %p84 = scmp.eq.s32.totalorder %s18, 7
    %p85 = por %p83, %p84
    %p87 = scmp.ne.s32.totalorder %s70, %s86
    %p88 = scmp.eq.s32.totalorder %s18, 0
    %p89 = por %p87, %p88
    %s90 = sadd.s32 %s20, 2
    %s91 = sadd.s32 %s27, 2
    %s92 = ssub.s32 %s19, %s31
    %s93 = ssub.s32 %s90, %s91
    %s94 = sor.u32 %s92, %s93
    %p95 = scmp.eq.s32.totalorder %s94, 0
    %s97 = sadd.s32 %s96, 1
    %s98 = scalar_select %p95, %s96, %s97
    %p101 = pneg %p95
    %p102 = scmp.eq.s32.totalorder %s12, 7
    %p103 = por %p101, %p102
    %p104 = scmp.ne.s32.totalorder %s96, %s99
    %p105 = scmp.eq.s32.totalorder %s12, 0
    %p106 = por %p104, %p105
    %p107 = scmp.ne.s32.totalorder %s96, %s99
    %p108 = scmp.eq.s32.totalorder %s17, 7
    %p109 = por %p107, %p108
    %p110 = scmp.ne.s32.totalorder %s99, %s100
    %p111 = scmp.eq.s32.totalorder %s17, 0
    %p112 = por %p110, %p111
    %p113 = scmp.ne.s32.totalorder %s99, %s100
    %p114 = scmp.eq.s32.totalorder %s18, 7
    %p115 = por %p113, %p114
    %p117 = scmp.ne.s32.totalorder %s100, %s116
    %p118 = scmp.eq.s32.totalorder %s18, 0
    %p119 = por %p117, %p118
    %s121 = sadd.s32 %s120, 1
    %p124 = scmp.eq.s32.totalorder %s12, 7
    %p125 = scmp.ne.s32.totalorder %s120, %s122
    %p126 = scmp.eq.s32.totalorder %s12, 0
    %p127 = por %p125, %p126
    %p128 = scmp.ne.s32.totalorder %s120, %s122
    %p129 = scmp.eq.s32.totalorder %s17, 7
    %p130 = por %p128, %p129
    %p131 = scmp.ne.s32.totalorder %s122, %s123
    %p132 = scmp.eq.s32.totalorder %s17, 0
    %p133 = por %p131, %p132
    %p134 = scmp.ne.s32.totalorder %s122, %s123
    %p135 = scmp.eq.s32.totalorder %s18, 7
    %p136 = por %p134, %p135
    %p138 = scmp.ne.s32.totalorder %s123, %s137
    %p139 = scmp.eq.s32.totalorder %s18, 0
    %p140 = por %p138, %p139
    %s142 = sadd.s32 %s141, 1
    %p145 = scmp.eq.s32.totalorder %s12, 7
    %p146 = scmp.ne.s32.totalorder %s141, %s143
    %p147 = scmp.eq.s32.totalorder %s12, 0
    %p148 = por %p146, %p147
    %p149 = scmp.ne.s32.totalorder %s141, %s143
    %p150 = scmp.eq.s32.totalorder %s17, 7
    %p151 = por %p149, %p150
    %p152 = scmp.ne.s32.totalorder %s143, %s144
    %p153 = scmp.eq.s32.totalorder %s17, 0
    %p154 = por %p152, %p153
    %p155 = scmp.ne.s32.totalorder %s143, %s144
    %p156 = scmp.eq.s32.totalorder %s18, 7
    %p157 = por %p155, %p156
    %p159 = scmp.ne.s32.totalorder %s144, %s158
    %p160 = scmp.eq.s32.totalorder %s18, 0
    %p161 = por %p159, %p160
    %s163 = sadd.s32 %s162, 1
    %p166 = scmp.eq.s32.totalorder %s12, 7
    %p167 = scmp.ne.s32.totalorder %s162, %s164
    %p168 = scmp.eq.s32.totalorder %s12, 0
    %p169 = por %p167, %p168
    %p170 = scmp.ne.s32.totalorder %s162, %s164
    %p171 = scmp.eq.s32.totalorder %s17, 7
    %p172 = por %p170, %p171
    %p173 = scmp.ne.s32.totalorder %s164, %s165
    %p174 = scmp.eq.s32.totalorder %s17, 0
    %p175 = por %p173, %p174
    %p176 = scmp.ne.s32.totalorder %s164, %s165
    %p177 = scmp.eq.s32.totalorder %s18, 7
    %p178 = por %p176, %p177
    %p180 = scmp.ne.s32.totalorder %s165, %s179
    %p181 = scmp.eq.s32.totalorder %s18, 0
    %p182 = por %p180, %p181
    %s183 = ssub.s32 %s19, %s31
    %s184 = ssub.s32 %s20, %s27
    %s185 = sor.u32 %s183, %s184
    %p186 = scmp.eq.s32.totalorder %s185, 0
    %s188 = sadd.s32 %s187, 1
    %s189 = scalar_select %p186, %s187, %s188
    %p192 = pneg %p186
    %p193 = scmp.eq.s32.totalorder %s12, 7
    %p194 = por %p192, %p193
    %p195 = scmp.ne.s32.totalorder %s187, %s190
    %p196 = scmp.eq.s32.totalorder %s12, 0
    %p197 = por %p195, %p196
    %p198 = scmp.ne.s32.totalorder %s187, %s190
    %p199 = scmp.eq.s32.totalorder %s17, 7
    %p200 = por %p198, %p199
    %p201 = scmp.ne.s32.totalorder %s190, %s191
    %p202 = scmp.eq.s32.totalorder %s17, 0
    %p203 = por %p201, %p202
    %p204 = scmp.ne.s32.totalorder %s190, %s191
    %p205 = scmp.eq.s32.totalorder %s18, 7
    %p206 = por %p204, %p205
    %p208 = scmp.ne.s32.totalorder %s191, %s207
    %p209 = scmp.eq.s32.totalorder %s18, 0
    %p210 = por %p208, %p209
    %p211 = scmp.le.s32.totalorder 1, %s12
    %p212 = scmp.lt.s32.totalorder %s12, 9
    %p213 = pnand %p211, %p212
    %p214 = pneg %p213
    // Predicated region
    $region9: #{bottleneck3d_forward.4} parent=5 // pred_check
      _
    $region10: #{bottleneck3d_forward.4} parent=5 // pred_check_branch
      %216 = sbr.rel (%p213) target = $region12
    $region11: #{bottleneck3d_forward.4} parent=5 // pred_region
      %s217 = ssub.s32 %s12, 1
      // Predicated region
      $region13: #{bottleneck3d_forward.4} parent=11 // pred_check
        %p218 = pneg %p133
      $region14: #{bottleneck3d_forward.4} parent=11 // pred_check_branch
        %220 = sbr.rel (%p218) target = $region16
      $region15: #{bottleneck3d_forward.4} parent=11 // pred_region
        _
      $region16: #{bottleneck3d_forward.4} parent=11 // pred_fallthru
        _
      // Predicated region
      $region17: #{bottleneck3d_forward.4} parent=11 // pred_check
        %p221 = pneg %p154
      $region18: #{bottleneck3d_forward.4} parent=11 // pred_check_branch
        %223 = sbr.rel (%p221) target = $region20
      $region19: #{bottleneck3d_forward.4} parent=11 // pred_region
        _
      $region20: #{bottleneck3d_forward.4} parent=11 // pred_fallthru
        _
      // Predicated region
      $region21: #{bottleneck3d_forward.4} parent=11 // pred_check
        %p224 = pneg %p175
      $region22: #{bottleneck3d_forward.4} parent=11 // pred_check_branch
        %226 = sbr.rel (%p224) target = $region24
      $region23: #{bottleneck3d_forward.4} parent=11 // pred_region
        _
      $region24: #{bottleneck3d_forward.4} parent=11 // pred_fallthru
        _
    $region12: #{bottleneck3d_forward.4} parent=5 // pred_fallthru
      _
    %p227 = scmp.lt.s32.totalorder %s12, 8
    // Predicated region
    $region25: #{bottleneck3d_forward.4} parent=5 // pred_check
      %p228 = pneg %p227
    $region26: #{bottleneck3d_forward.4} parent=5 // pred_check_branch
      %230 = sbr.rel (%p228) target = $region28
    $region27: #{bottleneck3d_forward.4} parent=5 // pred_region
      // Predicated region
      $region29: #{bottleneck3d_forward.4} parent=27 // pred_check
        %p231 = pneg %p46
      $region30: #{bottleneck3d_forward.4} parent=27 // pred_check_branch
        %233 = sbr.rel (%p231) target = $region32
      $region31: #{bottleneck3d_forward.4} parent=27 // pred_region
        %p234 = scmp.lt.s32.totalorder %s19, 1
        %s235 = scalar_select %p234, %s19, 1
        %p236 = scmp.lt.s32.totalorder %s20, 5
        %s237 = scalar_select %p236, %s20, 5
        %s238 = smul.addr %s237, 6
        %s239 = smul.addr %s235, 36
        %s240 = sadd.s32 %s238, %s239
        %s241 = smul.addr %s240, 4
        %s242 = scalar_lea.vmem %s0, %s241
      $region32: #{bottleneck3d_forward.4} parent=27 // pred_fallthru
        _
      // Predicated region
      $region33: #{bottleneck3d_forward.4} parent=27 // pred_check
        %p243 = pneg %p76
      $region34: #{bottleneck3d_forward.4} parent=27 // pred_check_branch
        %245 = sbr.rel (%p243) target = $region36
      $region35: #{bottleneck3d_forward.4} parent=27 // pred_region
        %s246 = sadd.s32 %s20, 1
        %p247 = scmp.lt.s32.totalorder %s19, 1
        %s248 = scalar_select %p247, %s19, 1
        %p249 = scmp.lt.s32.totalorder %s246, 5
        %s250 = scalar_select %p249, %s246, 5
        %s251 = smul.addr %s250, 6
        %s252 = smul.addr %s248, 36
        %s253 = sadd.s32 %s251, %s252
        %s254 = smul.addr %s253, 4
        %s255 = scalar_lea.vmem %s1, %s254
        %s256 = sadd.s32 %s20, 1
      $region36: #{bottleneck3d_forward.4} parent=27 // pred_fallthru
        _
      // Predicated region
      $region37: #{bottleneck3d_forward.4} parent=27 // pred_check
        %p257 = pneg %p106
      $region38: #{bottleneck3d_forward.4} parent=27 // pred_check_branch
        %259 = sbr.rel (%p257) target = $region40
      $region39: #{bottleneck3d_forward.4} parent=27 // pred_region
        %s260 = sadd.s32 %s20, 2
        %p261 = scmp.lt.s32.totalorder %s19, 1
        %s262 = scalar_select %p261, %s19, 1
        %p263 = scmp.lt.s32.totalorder %s260, 5
        %s264 = scalar_select %p263, %s260, 5
        %s265 = smul.addr %s264, 6
        %s266 = smul.addr %s262, 36
        %s267 = sadd.s32 %s265, %s266
        %s268 = smul.addr %s267, 4
        %s269 = scalar_lea.vmem %s2, %s268
        %s270 = sadd.s32 %s20, 2
      $region40: #{bottleneck3d_forward.4} parent=27 // pred_fallthru
        _
    $region28: #{bottleneck3d_forward.4} parent=5 // pred_fallthru
      _
    %p271 = scmp.le.s32.totalorder 1, %s12
    %p272 = scmp.lt.s32.totalorder %s12, 9
    %p273 = pnand %p271, %p272
    %p274 = pneg %p273
    // Predicated region
    $region41: #{bottleneck3d_forward.4} parent=5 // pred_check
      _
    $region42: #{bottleneck3d_forward.4} parent=5 // pred_check_branch
      %276 = sbr.rel (%p273) target = $region44
    $region43: #{bottleneck3d_forward.4} parent=5 // pred_region
      %s277 = ssub.s32 %s12, 1
      %p278 = scmp.lt.s32.totalorder %s21, 1
      %s279 = scalar_select %p278, %s21, 1
      %p280 = scmp.lt.s32.totalorder %s22, 5
      %s281 = scalar_select %p280, %s22, 5
      %s282 = smul.addr %s281, 6
      %s283 = smul.addr %s279, 36
      %s284 = sadd.s32 %s282, %s283
      %s285 = smul.addr %s284, 4
      %s286 = scalar_lea.vmem %s0, %s285
      %p287 = pneg %p52
      %p288 = pneg %p49
      %s289 = sadd.s32 %s22, 1
      %p290 = scmp.lt.s32.totalorder %s21, 1
      %s291 = scalar_select %p290, %s21, 1
      %p292 = scmp.lt.s32.totalorder %s289, 5
      %s293 = scalar_select %p292, %s289, 5
      %s294 = smul.addr %s293, 6
      %s295 = smul.addr %s291, 36
      %s296 = sadd.s32 %s294, %s295
      %s297 = smul.addr %s296, 4
      %s298 = scalar_lea.vmem %s1, %s297
      %p299 = pneg %p82
      %p300 = pneg %p79
      %s301 = sadd.s32 %s22, 2
      %p302 = scmp.lt.s32.totalorder %s21, 1
      %s303 = scalar_select %p302, %s21, 1
      %p304 = scmp.lt.s32.totalorder %s301, 5
      %s305 = scalar_select %p304, %s301, 5
      %s306 = smul.addr %s305, 6
      %s307 = smul.addr %s303, 36
      %s308 = sadd.s32 %s306, %s307
      %s309 = smul.addr %s308, 4
      %s310 = scalar_lea.vmem %s2, %s309
      %p311 = pneg %p112
      %p312 = pneg %p109
      %p313 = pneg %p133
      %p314 = pneg %p130
      %p315 = pneg %p154
      %p316 = pneg %p151
      %p317 = pneg %p175
      %p318 = pneg %p172
      %p319 = pneg %p203
      %p320 = pneg %p200
      %p321 = scmp.lt.s32.totalorder %s21, 1
      %s322 = scalar_select %p321, %s21, 1
      %p323 = scmp.lt.s32.totalorder %s22, 3
      %s324 = scalar_select %p323, %s22, 3
      %s325 = smul.addr %s324, 4
      %s326 = smul.addr %s322, 16
      %s327 = sadd.s32 %s325, %s326
      %s328 = smul.addr %s327, 2
      %s329 = scalar_lea.vmem %s6, %s328
      %p330 = scmp.lt.s32.totalorder %s21, 1
      %s331 = scalar_select %p330, %s21, 1
      %p332 = scmp.lt.s32.totalorder %s22, 5
      %s333 = scalar_select %p332, %s22, 5
      %s334 = smul.addr %s333, 6
      %s335 = smul.addr %s331, 36
      %s336 = sadd.s32 %s334, %s335
      %s337 = smul.addr %s336, 4
      %s338 = scalar_lea.vmem %s0, %s337
      %s339 = sadd.s32 %s22, 1
      %p340 = scmp.lt.s32.totalorder %s21, 1
      %s341 = scalar_select %p340, %s21, 1
      %p342 = scmp.lt.s32.totalorder %s339, 5
      %s343 = scalar_select %p342, %s339, 5
      %s344 = smul.addr %s343, 6
      %s345 = smul.addr %s341, 36
      %s346 = sadd.s32 %s344, %s345
      %s347 = smul.addr %s346, 4
      %s348 = scalar_lea.vmem %s1, %s347
      %s349 = sadd.s32 %s22, 1
      %s350 = sadd.s32 %s22, 2
      %p351 = scmp.lt.s32.totalorder %s21, 1
      %s352 = scalar_select %p351, %s21, 1
      %p353 = scmp.lt.s32.totalorder %s350, 5
      %s354 = scalar_select %p353, %s350, 5
      %s355 = smul.addr %s354, 6
      %s356 = smul.addr %s352, 36
      %s357 = sadd.s32 %s355, %s356
      %s358 = smul.addr %s357, 4
      %s359 = scalar_lea.vmem %s2, %s358
      %s360 = sadd.s32 %s22, 2
      %p361 = scmp.lt.s32.totalorder %s21, 1
      %s362 = scalar_select %p361, %s21, 1
      %p363 = scmp.lt.s32.totalorder %s22, 3
      %s364 = scalar_select %p363, %s22, 3
      %s365 = smul.addr %s364, 4
      %s366 = smul.addr %s362, 16
      %s367 = sadd.s32 %s365, %s366
      %s368 = smul.addr %s367, 2
      %s369 = scalar_lea.vmem %s6, %s368
      %v371 = vld [vmem:[%s338] sm:$0x7]
      %v372 = vld [vmem:[%s338 + $0x4] sm:$0x7]
      %v373 = vld [vmem:[%s338 + $0x8] sm:$0x7]
      %v374 = vld [vmem:[%s338 + $0xc] sm:$0x7]
      %v375 = vld [vmem:[%s338 + $0x10] sm:$0x7]
      %v376 = vld [vmem:[%s338 + $0x14] sm:$0x7]
      %v377 = vld [vmem:[%s3] sm:$0x3]
      %v382 = vrot.slane %v371, 2
      %v383 = vrot.slane %v372, 2
      %v384 = vrot.slane %v373, 2
      %v385 = vrot.slane %v374, 2
      %vm386 = vcmask 1041408
      %v389 = vsel %vm386, %v371, %v382
      %vm390 = vcmask 1043458
      %v391 = vsel %vm390, %v371, %v382
      %v393 = vrot.slane %v391, 2
      %v396 = vsel %vm386, %v372, %v383
      %v397 = vsel %vm390, %v372, %v383
      %v399 = vrot.slane %v397, 2
      %v402 = vsel %vm386, %v373, %v384
      %v403 = vsel %vm390, %v373, %v384
      %v405 = vrot.slane %v403, 2
      %v408 = vsel %vm386, %v374, %v385
      %v409 = vsel %vm390, %v374, %v385
      %v411 = vrot.slane %v409, 2
      %vm412 = vsmask.f32 1280
      %vm413 = vsmask.f32 3336
      %vm414 = vmor %vm412, %vm413
      %vm415 = vsmask.f32 5392
      %vm416 = vmor %vm414, %vm415
      %vm417 = vsmask.f32 7448
      %vm418 = vmor %vm416, %vm417
      %v419 = vshrl.u32 %v389, 16
      %v421 = vrot.slane %v419, 6
      %v422 = vshll.u32 %v389, 16
      %v424 = vrot.slane %v422, 7
      %v425 = vor.u32 %v421, %v424
      %v426 = vrot.slane %v425, 2
      %v428 = vshll.u32 %v393, 16
      %v430 = vrot.slane %v428, 7
      %v431 = vsel %vm418, %v426, %v430
      %v432 = vshrl.u32 %v396, 16
      %v434 = vrot.slane %v432, 6
      %v435 = vshll.u32 %v396, 16
      %v437 = vrot.slane %v435, 7
      %v438 = vor.u32 %v434, %v437
      %v439 = vrot.slane %v438, 2
      %v441 = vshll.u32 %v399, 16
      %v443 = vrot.slane %v441, 7
      %v444 = vsel %vm418, %v439, %v443
      %v445 = vshrl.u32 %v402, 16
      %v447 = vrot.slane %v445, 6
      %v448 = vshll.u32 %v402, 16
      %v450 = vrot.slane %v448, 7
      %v451 = vor.u32 %v447, %v450
      %v452 = vrot.slane %v451, 2
      %v454 = vshll.u32 %v405, 16
      %v456 = vrot.slane %v454, 7
      %v457 = vsel %vm418, %v452, %v456
      %v458 = vshrl.u32 %v408, 16
      %v460 = vrot.slane %v458, 6
      %v461 = vshll.u32 %v408, 16
      %v463 = vrot.slane %v461, 7
      %v464 = vor.u32 %v460, %v463
      %v465 = vrot.slane %v464, 2
      %v467 = vshll.u32 %v411, 16
      %v469 = vrot.slane %v467, 7
      %v470 = vsel %vm418, %v465, %v469
      %s471 = scalar_lea.vmem %s3, 2
      %v472 = vld [vmem:[%s471] sm:$0x3]
      %474 = vst [vmem:[#allocation1] ss:$4 sm:$0xff] %v431
      %s476 = scalar_lea.vmem [#allocation1], 1
      %477 = vst [vmem:[%s476] ss:$4 sm:$0xff] %v444
      %s479 = scalar_lea.vmem [#allocation1], 2
      %480 = vst [vmem:[%s479] ss:$4 sm:$0xff] %v457
      %s482 = scalar_lea.vmem [#allocation1], 3
      %483 = vst [vmem:[%s482] ss:$4 sm:$0xff] %v470
      %v484 = vld.sshfl [vmem:[#allocation1] sm:$0xff pattern:$0x73625140]
      %vm485 = vcmask 31744
      %v486 = vsel %vm485, %v484, 0
      %v489 = vsel %vm386, %v472, 0
      %491 = vmatpush.bf16.msra.mxu0 0
      %492 = vmatpush.bf16.msra.mxu0 0
      %493 = vmatpush.bf16.msra.mxu0 0
      %494 = vmatpush.bf16.msra.mxu0 0
      %495 = vmatpush.bf16.msra.mxu0 0
      %496 = vmatpush.bf16.msra.mxu0 0
      %497 = vmatpush.bf16.msra.mxu0 0
      %498 = vmatpush.bf16.msra.mxu0 %v489
      %499 = vmatmul.bf16.gmra.mxu0 %v486
      %v500 = vpop.f32.mrf.mxu0
      %v501 = vadd.f32 0.0, %v500
      %v502 = vpop.f32.mrf.mxu0
      %v503 = vadd.f32 0.0, %v502
      %504 = vdwg.mxu0
      %505 = vst [vmem:[#allocation1] ss:$4 sm:$0xff] %v371
      %s506 = scalar_lea.vmem [#allocation1], 1
      %507 = vst [vmem:[%s506] ss:$4 sm:$0xff] %v372
      %s508 = scalar_lea.vmem [#allocation1], 2
      %509 = vst [vmem:[%s508] ss:$4 sm:$0xff] %v373
      %s510 = scalar_lea.vmem [#allocation1], 3
      %511 = vst [vmem:[%s510] ss:$4 sm:$0xff] %v374
      %v512 = vld.sshfl [vmem:[#allocation1] sm:$0xff pattern:$0x73625140]
      %v513 = vsel %vm485, %v512, 0
      %v516 = vsel %vm386, %v377, 0
      %518 = vmatpush.bf16.msra.mxu0 0
      %519 = vmatpush.bf16.msra.mxu0 0
      %520 = vmatpush.bf16.msra.mxu0 0
      %521 = vmatpush.bf16.msra.mxu0 0
      %522 = vmatpush.bf16.msra.mxu0 0
      %523 = vmatpush.bf16.msra.mxu0 0
      %524 = vmatpush.bf16.msra.mxu0 0
      %525 = vmatpush.bf16.msra.mxu0 %v516
      %526 = vmatmul.bf16.gmra.mxu0 %v513
      %v527 = vpop.f32.mrf.mxu0
      %v528 = vadd.f32 %v501, %v527
      %v529 = vpop.f32.mrf.mxu0
      %v530 = vadd.f32 %v503, %v529
      %531 = vdwg.mxu0
      %vm536 = vcmask 1040384
      %vm537 = vcmask 1042434
      %vm538 = vmor %vm536, %vm537
      %vm539 = vcmask 1044484
      %vm540 = vmor %vm538, %vm539
      %vm541 = vcmask 1046534
      %vm542 = vmor %vm540, %vm541
      %v543 = vrot.slane %v389, 7
      %v544 = vrot.slane %v543, 2
      %v545 = vrot.slane %v393, 7
      %v546 = vsel %vm542, %v544, %v545
      %v547 = vrot.slane %v396, 7
      %v548 = vrot.slane %v547, 2
      %v549 = vrot.slane %v399, 7
      %v550 = vsel %vm542, %v548, %v549
      %v551 = vrot.slane %v402, 7
      %v552 = vrot.slane %v551, 2
      %v553 = vrot.slane %v405, 7
      %v554 = vsel %vm542, %v552, %v553
      %v555 = vrot.slane %v408, 7
      %v556 = vrot.slane %v555, 2
      %v557 = vrot.slane %v411, 7
      %v558 = vsel %vm542, %v556, %v557
      %s559 = scalar_lea.vmem %s3, 4
      %v560 = vld [vmem:[%s559] sm:$0x3]
      %562 = vst [vmem:[#allocation1] ss:$4 sm:$0xff] %v546
      %s564 = scalar_lea.vmem [#allocation1], 1
      %565 = vst [vmem:[%s564] ss:$4 sm:$0xff] %v550
      %s567 = scalar_lea.vmem [#allocation1], 2
      %568 = vst [vmem:[%s567] ss:$4 sm:$0xff] %v554
      %s570 = scalar_lea.vmem [#allocation1], 3
      %571 = vst [vmem:[%s570] ss:$4 sm:$0xff] %v558
      %v572 = vld.sshfl [vmem:[#allocation1] sm:$0xff pattern:$0x73625140]
      %v573 = vsel %vm485, %v572, 0
      %v576 = vsel %vm386, %v560, 0
      %578 = vmatpush.bf16.msra.mxu0 0
      %579 = vmatpush.bf16.msra.mxu0 0
      %580 = vmatpush.bf16.msra.mxu0 0
      %581 = vmatpush.bf16.msra.mxu0 0
      %582 = vmatpush.bf16.msra.mxu0 0
      %583 = vmatpush.bf16.msra.mxu0 0
      %584 = vmatpush.bf16.msra.mxu0 0
      %585 = vmatpush.bf16.msra.mxu0 %v576
      %586 = vmatmul.bf16.gmra.mxu0 %v573
      %v587 = vpop.f32.mrf.mxu0
      %v588 = vadd.f32 0.0, %v587
      %v589 = vpop.f32.mrf.mxu0
      %v590 = vadd.f32 0.0, %v589
      %591 = vdwg.mxu0
      %v592 = vadd.f32 %v528, %v588
      %v593 = vadd.f32 %v530, %v590
      %s594 = scalar_lea.vmem %s3, 6
      %v595 = vld [vmem:[%s594] sm:$0x3]
      %596 = vst [vmem:[#allocation1] ss:$4 sm:$0xff] %v372
      %s597 = scalar_lea.vmem [#allocation1], 1
      %598 = vst [vmem:[%s597] ss:$4 sm:$0xff] %v373
      %s599 = scalar_lea.vmem [#allocation1], 2
      %600 = vst [vmem:[%s599] ss:$4 sm:$0xff] %v374
      %s602 = scalar_lea.vmem [#allocation1], 3
      %603 = vst [vmem:[%s602] ss:$4 sm:$0xff] %v375
      %v604 = vld.sshfl [vmem:[#allocation1] sm:$0xff pattern:$0x73625140]
      %v605 = vsel %vm485, %v604, 0
      %v608 = vsel %vm386, %v595, 0
      %610 = vmatpush.bf16.msra.mxu0 0
      %611 = vmatpush.bf16.msra.mxu0 0
      %612 = vmatpush.bf16.msra.mxu0 0
      %613 = vmatpush.bf16.msra.mxu0 0
      %614 = vmatpush.bf16.msra.mxu0 0
      %615 = vmatpush.bf16.msra.mxu0 0
      %616 = vmatpush.bf16.msra.mxu0 0
      %617 = vmatpush.bf16.msra.mxu0 %v608
      %618 = vmatmul.bf16.gmra.mxu0 %v605
      %v619 = vpop.f32.mrf.mxu0
      %v620 = vadd.f32 0.0, %v619
      %v621 = vpop.f32.mrf.mxu0
      %v622 = vadd.f32 0.0, %v621
      %623 = vdwg.mxu0
      %v624 = vadd.f32 %v592, %v620
      %v625 = vadd.f32 %v593, %v622
      %v627 = vrot.slane %v375, 2
      %v629 = vsel %vm386, %v375, %v627
      %v630 = vsel %vm390, %v375, %v627
      %v632 = vrot.slane %v630, 2
      %v633 = vshrl.u32 %v629, 16
      %v635 = vrot.slane %v633, 6
      %v636 = vshll.u32 %v629, 16
      %v638 = vrot.slane %v636, 7
      %v639 = vor.u32 %v635, %v638
      %v640 = vrot.slane %v639, 2
      %v642 = vshll.u32 %v632, 16
      %v644 = vrot.slane %v642, 7
      %v645 = vsel %vm418, %v640, %v644
      %s646 = scalar_lea.vmem %s3, 8
      %v647 = vld [vmem:[%s646] sm:$0x3]
      %648 = vst [vmem:[#allocation1] ss:$4 sm:$0xff] %v444
      %s649 = scalar_lea.vmem [#allocation1], 1
      %650 = vst [vmem:[%s649] ss:$4 sm:$0xff] %v457
      %s651 = scalar_lea.vmem [#allocation1], 2
      %652 = vst [vmem:[%s651] ss:$4 sm:$0xff] %v470
      %s654 = scalar_lea.vmem [#allocation1], 3
      %655 = vst [vmem:[%s654] ss:$4 sm:$0xff] %v645
      %v656 = vld.sshfl [vmem:[#allocation1] sm:$0xff pattern:$0x73625140]
      %v657 = vsel %vm485, %v656, 0
      %v660 = vsel %vm386, %v647, 0
      %662 = vmatpush.bf16.msra.mxu0 0
      %663 = vmatpush.bf16.msra.mxu0 0
      %664 = vmatpush.bf16.msra.mxu0 0
      %665 = vmatpush.bf16.msra.mxu0 0
      %666 = vmatpush.bf16.msra.mxu0 0
      %667 = vmatpush.bf16.msra.mxu0 0
      %668 = vmatpush.bf16.msra.mxu0 0
      %669 = vmatpush.bf16.msra.mxu0 %v660
      %670 = vmatmul.bf16.gmra.mxu0 %v657
      %v671 = vpop.f32.mrf.mxu0
      %v672 = vadd.f32 0.0, %v671
      %v673 = vpop.f32.mrf.mxu0
      %v674 = vadd.f32 0.0, %v673
      %675 = vdwg.mxu0
      %v676 = vadd.f32 %v624, %v672
      %v677 = vadd.f32 %v625, %v674
      %v679 = vrot.slane %v629, 7
      %v680 = vrot.slane %v679, 2
      %v681 = vrot.slane %v632, 7
      %v682 = vsel %vm542, %v680, %v681
      %s683 = scalar_lea.vmem %s3, 10
      %v684 = vld [vmem:[%s683] sm:$0x3]
      %685 = vst [vmem:[#allocation1] ss:$4 sm:$0xff] %v550
      %s686 = scalar_lea.vmem [#allocation1], 1
      %687 = vst [vmem:[%s686] ss:$4 sm:$0xff] %v554
      %s688 = scalar_lea.vmem [#allocation1], 2
      %689 = vst [vmem:[%s688] ss:$4 sm:$0xff] %v558
      %s691 = scalar_lea.vmem [#allocation1], 3
      %692 = vst [vmem:[%s691] ss:$4 sm:$0xff] %v682
      %v693 = vld.sshfl [vmem:[#allocation1] sm:$0xff pattern:$0x73625140]
      %v694 = vsel %vm485, %v693, 0
      %v697 = vsel %vm386, %v684, 0
      %699 = vmatpush.bf16.msra.mxu0 0
      %700 = vmatpush.bf16.msra.mxu0 0
      %701 = vmatpush.bf16.msra.mxu0 0
      %702 = vmatpush.bf16.msra.mxu0 0
      %703 = vmatpush.bf16.msra.mxu0 0
      %704 = vmatpush.bf16.msra.mxu0 0
      %705 = vmatpush.bf16.msra.mxu0 0
      %706 = vmatpush.bf16.msra.mxu0 %v697
      %707 = vmatmul.bf16.gmra.mxu0 %v694
      %v708 = vpop.f32.mrf.mxu0
      %v709 = vadd.f32 0.0, %v708
      %v710 = vpop.f32.mrf.mxu0
      %v711 = vadd.f32 0.0, %v710
      %712 = vdwg.mxu0
      %v713 = vadd.f32 %v676, %v709
      %v714 = vadd.f32 %v677, %v711
      %s715 = scalar_lea.vmem %s3, 12
      %v716 = vld [vmem:[%s715] sm:$0x3]
      %717 = vst [vmem:[#allocation1] ss:$4 sm:$0xff] %v373
      %s718 = scalar_lea.vmem [#allocation1], 1
      %719 = vst [vmem:[%s718] ss:$4 sm:$0xff] %v374
      %s720 = scalar_lea.vmem [#allocation1], 2
      %721 = vst [vmem:[%s720] ss:$4 sm:$0xff] %v375
      %s723 = scalar_lea.vmem [#allocation1], 3
      %724 = vst [vmem:[%s723] ss:$4 sm:$0xff] %v376
      %v725 = vld.sshfl [vmem:[#allocation1] sm:$0xff pattern:$0x73625140]
      %v726 = vsel %vm485, %v725, 0
      %v729 = vsel %vm386, %v716, 0
      %731 = vmatpush.bf16.msra.mxu0 0
      %732 = vmatpush.bf16.msra.mxu0 0
      %733 = vmatpush.bf16.msra.mxu0 0
      %734 = vmatpush.bf16.msra.mxu0 0
      %735 = vmatpush.bf16.msra.mxu0 0
      %736 = vmatpush.bf16.msra.mxu0 0
      %737 = vmatpush.bf16.msra.mxu0 0
      %738 = vmatpush.bf16.msra.mxu0 %v729
      %739 = vmatmul.bf16.gmra.mxu0 %v726
      %v740 = vpop.f32.mrf.mxu0
      %v741 = vadd.f32 0.0, %v740
      %v742 = vpop.f32.mrf.mxu0
      %v743 = vadd.f32 0.0, %v742
      %744 = vdwg.mxu0
      %v745 = vadd.f32 %v713, %v741
      %v746 = vadd.f32 %v714, %v743
      %v748 = vrot.slane %v376, 2
      %v750 = vsel %vm386, %v376, %v748
      %v751 = vsel %vm390, %v376, %v748
      %v753 = vrot.slane %v751, 2
      %v754 = vshrl.u32 %v750, 16
      %v756 = vrot.slane %v754, 6
      %v757 = vshll.u32 %v750, 16
      %v759 = vrot.slane %v757, 7
      %v760 = vor.u32 %v756, %v759
      %v761 = vrot.slane %v760, 2
      %v763 = vshll.u32 %v753, 16
      %v765 = vrot.slane %v763, 7
      %v766 = vsel %vm418, %v761, %v765
      %s767 = scalar_lea.vmem %s3, 14
      %v768 = vld [vmem:[%s767] sm:$0x3]
      %769 = vst [vmem:[#allocation1] ss:$4 sm:$0xff] %v457
      %s770 = scalar_lea.vmem [#allocation1], 1
      %771 = vst [vmem:[%s770] ss:$4 sm:$0xff] %v470
      %s772 = scalar_lea.vmem [#allocation1], 2
      %773 = vst [vmem:[%s772] ss:$4 sm:$0xff] %v645
      %s775 = scalar_lea.vmem [#allocation1], 3
      %776 = vst [vmem:[%s775] ss:$4 sm:$0xff] %v766
      %v777 = vld.sshfl [vmem:[#allocation1] sm:$0xff pattern:$0x73625140]
      %v778 = vsel %vm485, %v777, 0
      %v781 = vsel %vm386, %v768, 0
      %783 = vmatpush.bf16.msra.mxu0 0
      %784 = vmatpush.bf16.msra.mxu0 0
      %785 = vmatpush.bf16.msra.mxu0 0
      %786 = vmatpush.bf16.msra.mxu0 0
      %787 = vmatpush.bf16.msra.mxu0 0
      %788 = vmatpush.bf16.msra.mxu0 0
      %789 = vmatpush.bf16.msra.mxu0 0
      %790 = vmatpush.bf16.msra.mxu0 %v781
      %791 = vmatmul.bf16.gmra.mxu0 %v778
      %v792 = vpop.f32.mrf.mxu0
      %v793 = vadd.f32 0.0, %v792
      %v794 = vpop.f32.mrf.mxu0
      %v795 = vadd.f32 0.0, %v794
      %796 = vdwg.mxu0
      %v797 = vadd.f32 %v745, %v793
      %v798 = vadd.f32 %v746, %v795
      %v800 = vrot.slane %v750, 7
      %v801 = vrot.slane %v800, 2
      %v802 = vrot.slane %v753, 7
      %v803 = vsel %vm542, %v801, %v802
      %s804 = scalar_lea.vmem %s3, 16
      %v805 = vld [vmem:[%s804] sm:$0x3]
      %806 = vst [vmem:[#allocation1] ss:$4 sm:$0xff] %v554
      %s807 = scalar_lea.vmem [#allocation1], 1
      %808 = vst [vmem:[%s807] ss:$4 sm:$0xff] %v558
      %s809 = scalar_lea.vmem [#allocation1], 2
      %810 = vst [vmem:[%s809] ss:$4 sm:$0xff] %v682
      %s812 = scalar_lea.vmem [#allocation1], 3
      %813 = vst [vmem:[%s812] ss:$4 sm:$0xff] %v803
      %v814 = vld.sshfl [vmem:[#allocation1] sm:$0xff pattern:$0x73625140]
      %v815 = vsel %vm485, %v814, 0
      %v818 = vsel %vm386, %v805, 0
      %820 = vmatpush.bf16.msra.mxu0 0
      %821 = vmatpush.bf16.msra.mxu0 0
      %822 = vmatpush.bf16.msra.mxu0 0
      %823 = vmatpush.bf16.msra.mxu0 0
      %824 = vmatpush.bf16.msra.mxu0 0
      %825 = vmatpush.bf16.msra.mxu0 0
      %826 = vmatpush.bf16.msra.mxu0 0
      %827 = vmatpush.bf16.msra.mxu0 %v818
      %828 = vmatmul.bf16.gmra.mxu0 %v815
      %v829 = vpop.f32.mrf.mxu0
      %v830 = vadd.f32 0.0, %v829
      %v831 = vpop.f32.mrf.mxu0
      %v832 = vadd.f32 0.0, %v831
      %833 = vdwg.mxu0
      %v834 = vadd.f32 %v797, %v830
      %v835 = vadd.f32 %v798, %v832
      %v836 = vld [vmem:[%s348] sm:$0x7]
      %v837 = vld [vmem:[%s348 + $0x4] sm:$0x7]
      %v838 = vld [vmem:[%s348 + $0x8] sm:$0x7]
      %v839 = vld [vmem:[%s348 + $0xc] sm:$0x7]
      %v840 = vld [vmem:[%s348 + $0x10] sm:$0x7]
      %v841 = vld [vmem:[%s348 + $0x14] sm:$0x7]
      %s842 = scalar_lea.vmem %s3, 18
      %v843 = vld [vmem:[%s842] sm:$0x3]
      %845 = vst [vmem:[#allocation1] ss:$4 sm:$0xff] %v836
      %s847 = scalar_lea.vmem [#allocation1], 1
      %848 = vst [vmem:[%s847] ss:$4 sm:$0xff] %v837
      %s850 = scalar_lea.vmem [#allocation1], 2
      %851 = vst [vmem:[%s850] ss:$4 sm:$0xff] %v838
      %s853 = scalar_lea.vmem [#allocation1], 3
      %854 = vst [vmem:[%s853] ss:$4 sm:$0xff] %v839
      %v855 = vld.sshfl [vmem:[#allocation1] sm:$0xff pattern:$0x73625140]
      %v856 = vsel %vm485, %v855, 0
      %v859 = vsel %vm386, %v843, 0
      %861 = vmatpush.bf16.msra.mxu0 0
      %862 = vmatpush.bf16.msra.mxu0 0
      %863 = vmatpush.bf16.msra.mxu0 0
      %864 = vmatpush.bf16.msra.mxu0 0
      %865 = vmatpush.bf16.msra.mxu0 0
      %866 = vmatpush.bf16.msra.mxu0 0
      %867 = vmatpush.bf16.msra.mxu0 0
      %868 = vmatpush.bf16.msra.mxu0 %v859
      %869 = vmatmul.bf16.gmra.mxu0 %v856
      %v870 = vpop.f32.mrf.mxu0
      %v871 = vadd.f32 0.0, %v870
      %v872 = vpop.f32.mrf.mxu0
      %v873 = vadd.f32 0.0, %v872
      %874 = vdwg.mxu0
      %v875 = vadd.f32 %v834, %v871
      %v876 = vadd.f32 %v835, %v873
      %v881 = vrot.slane %v836, 2
      %v882 = vrot.slane %v837, 2
      %v883 = vrot.slane %v838, 2
      %v884 = vrot.slane %v839, 2
      %v886 = vsel %vm386, %v836, %v881
      %v887 = vsel %vm390, %v836, %v881
      %v889 = vrot.slane %v887, 2
      %v891 = vsel %vm386, %v837, %v882
      %v892 = vsel %vm390, %v837, %v882
      %v894 = vrot.slane %v892, 2
      %v896 = vsel %vm386, %v838, %v883
      %v897 = vsel %vm390, %v838, %v883
      %v899 = vrot.slane %v897, 2
      %v901 = vsel %vm386, %v839, %v884
      %v902 = vsel %vm390, %v839, %v884
      %v904 = vrot.slane %v902, 2
      %v905 = vshrl.u32 %v886, 16
      %v907 = vrot.slane %v905, 6
      %v908 = vshll.u32 %v886, 16
      %v910 = vrot.slane %v908, 7
      %v911 = vor.u32 %v907, %v910
      %v912 = vrot.slane %v911, 2
      %v914 = vshll.u32 %v889, 16
      %v916 = vrot.slane %v914, 7
      %v917 = vsel %vm418, %v912, %v916
      %v918 = vshrl.u32 %v891, 16
      %v920 = vrot.slane %v918, 6
      %v921 = vshll.u32 %v891, 16
      %v923 = vrot.slane %v921, 7
      %v924 = vor.u32 %v920, %v923
      %v925 = vrot.slane %v924, 2
      %v927 = vshll.u32 %v894, 16
      %v929 = vrot.slane %v927, 7
      %v930 = vsel %vm418, %v925, %v929
      %v931 = vshrl.u32 %v896, 16
      %v933 = vrot.slane %v931, 6
      %v934 = vshll.u32 %v896, 16
      %v936 = vrot.slane %v934, 7
      %v937 = vor.u32 %v933, %v936
      %v938 = vrot.slane %v937, 2
      %v940 = vshll.u32 %v899, 16
      %v942 = vrot.slane %v940, 7
      %v943 = vsel %vm418, %v938, %v942
      %v944 = vshrl.u32 %v901, 16
      %v946 = vrot.slane %v944, 6
      %v947 = vshll.u32 %v901, 16
      %v949 = vrot.slane %v947, 7
      %v950 = vor.u32 %v946, %v949
      %v951 = vrot.slane %v950, 2
      %v953 = vshll.u32 %v904, 16
      %v955 = vrot.slane %v953, 7
      %v956 = vsel %vm418, %v951, %v955
      %s957 = scalar_lea.vmem %s3, 20
      %v958 = vld [vmem:[%s957] sm:$0x3]
      %960 = vst [vmem:[#allocation1] ss:$4 sm:$0xff] %v917
      %s962 = scalar_lea.vmem [#allocation1], 1
      %963 = vst [vmem:[%s962] ss:$4 sm:$0xff] %v930
      %s965 = scalar_lea.vmem [#allocation1], 2
      %966 = vst [vmem:[%s965] ss:$4 sm:$0xff] %v943
      %s968 = scalar_lea.vmem [#allocation1], 3
      %969 = vst [vmem:[%s968] ss:$4 sm:$0xff] %v956
      %v970 = vld.sshfl [vmem:[#allocation1] sm:$0xff pattern:$0x73625140]
      %v971 = vsel %vm485, %v970, 0
      %v974 = vsel %vm386, %v958, 0
      %976 = vmatpush.bf16.msra.mxu0 0
      %977 = vmatpush.bf16.msra.mxu0 0
      %978 = vmatpush.bf16.msra.mxu0 0
      %979 = vmatpush.bf16.msra.mxu0 0
      %980 = vmatpush.bf16.msra.mxu0 0
      %981 = vmatpush.bf16.msra.mxu0 0
      %982 = vmatpush.bf16.msra.mxu0 0
      %983 = vmatpush.bf16.msra.mxu0 %v974
      %984 = vmatmul.bf16.gmra.mxu0 %v971
      %v985 = vpop.f32.mrf.mxu0
      %v986 = vadd.f32 0.0, %v985
      %v987 = vpop.f32.mrf.mxu0
      %v988 = vadd.f32 0.0, %v987
      %989 = vdwg.mxu0
      %v990 = vadd.f32 %v875, %v986
      %v991 = vadd.f32 %v876, %v988
      %v996 = vrot.slane %v886, 7
      %v997 = vrot.slane %v996, 2
      %v998 = vrot.slane %v889, 7
      %v999 = vsel %vm542, %v997, %v998
      %v1000 = vrot.slane %v891, 7
      %v1001 = vrot.slane %v1000, 2
      %v1002 = vrot.slane %v894, 7
      %v1003 = vsel %vm542, %v1001, %v1002
      %v1004 = vrot.slane %v896, 7
      %v1005 = vrot.slane %v1004, 2
      %v1006 = vrot.slane %v899, 7
      %v1007 = vsel %vm542, %v1005, %v1006
      %v1008 = vrot.slane %v901, 7
      %v1009 = vrot.slane %v1008, 2
      %v1010 = vrot.slane %v904, 7
      %v1011 = vsel %vm542, %v1009, %v1010
      %s1012 = scalar_lea.vmem %s3, 22
      %v1013 = vld [vmem:[%s1012] sm:$0x3]
      %1015 = vst [vmem:[#allocation1] ss:$4 sm:$0xff] %v999
      %s1017 = scalar_lea.vmem [#allocation1], 1
      %1018 = vst [vmem:[%s1017] ss:$4 sm:$0xff] %v1003
      %s1020 = scalar_lea.vmem [#allocation1], 2
      %1021 = vst [vmem:[%s1020] ss:$4 sm:$0xff] %v1007
      %s1023 = scalar_lea.vmem [#allocation1], 3
      %1024 = vst [vmem:[%s1023] ss:$4 sm:$0xff] %v1011
      %v1025 = vld.sshfl [vmem:[#allocation1] sm:$0xff pattern:$0x73625140]
      %v1026 = vsel %vm485, %v1025, 0
      %v1029 = vsel %vm386, %v1013, 0
      %1031 = vmatpush.bf16.msra.mxu0 0
      %1032 = vmatpush.bf16.msra.mxu0 0
      %1033 = vmatpush.bf16.msra.mxu0 0
      %1034 = vmatpush.bf16.msra.mxu0 0
      %1035 = vmatpush.bf16.msra.mxu0 0
      %1036 = vmatpush.bf16.msra.mxu0 0
      %1037 = vmatpush.bf16.msra.mxu0 0
      %1038 = vmatpush.bf16.msra.mxu0 %v1029
      %1039 = vmatmul.bf16.gmra.mxu0 %v1026
      %v1040 = vpop.f32.mrf.mxu0
      %v1041 = vadd.f32 0.0, %v1040
      %v1042 = vpop.f32.mrf.mxu0
      %v1043 = vadd.f32 0.0, %v1042
      %1044 = vdwg.mxu0
      %v1045 = vadd.f32 %v990, %v1041
      %v1046 = vadd.f32 %v991, %v1043
      %s1047 = scalar_lea.vmem %s3, 24
      %v1048 = vld [vmem:[%s1047] sm:$0x3]
      %1049 = vst [vmem:[#allocation1] ss:$4 sm:$0xff] %v837
      %s1050 = scalar_lea.vmem [#allocation1], 1
      %1051 = vst [vmem:[%s1050] ss:$4 sm:$0xff] %v838
      %s1052 = scalar_lea.vmem [#allocation1], 2
      %1053 = vst [vmem:[%s1052] ss:$4 sm:$0xff] %v839
      %s1055 = scalar_lea.vmem [#allocation1], 3
      %1056 = vst [vmem:[%s1055] ss:$4 sm:$0xff] %v840
      %v1057 = vld.sshfl [vmem:[#allocation1] sm:$0xff pattern:$0x73625140]
      %v1058 = vsel %vm485, %v1057, 0
      %v1061 = vsel %vm386, %v1048, 0
      %1063 = vmatpush.bf16.msra.mxu0 0
      %1064 = vmatpush.bf16.msra.mxu0 0
      %1065 = vmatpush.bf16.msra.mxu0 0
      %1066 = vmatpush.bf16.msra.mxu0 0
      %1067 = vmatpush.bf16.msra.mxu0 0
      %1068 = vmatpush.bf16.msra.mxu0 0
      %1069 = vmatpush.bf16.msra.mxu0 0
      %1070 = vmatpush.bf16.msra.mxu0 %v1061
      %1071 = vmatmul.bf16.gmra.mxu0 %v1058
      %v1072 = vpop.f32.mrf.mxu0
      %v1073 = vadd.f32 0.0, %v1072
      %v1074 = vpop.f32.mrf.mxu0
      %v1075 = vadd.f32 0.0, %v1074
      %1076 = vdwg.mxu0
      %v1077 = vadd.f32 %v1045, %v1073
      %v1078 = vadd.f32 %v1046, %v1075
      %v1080 = vrot.slane %v840, 2
      %v1082 = vsel %vm386, %v840, %v1080
      %v1083 = vsel %vm390, %v840, %v1080
      %v1085 = vrot.slane %v1083, 2
      %v1086 = vshrl.u32 %v1082, 16
      %v1088 = vrot.slane %v1086, 6
      %v1089 = vshll.u32 %v1082, 16
      %v1091 = vrot.slane %v1089, 7
      %v1092 = vor.u32 %v1088, %v1091
      %v1093 = vrot.slane %v1092, 2
      %v1095 = vshll.u32 %v1085, 16
      %v1097 = vrot.slane %v1095, 7
      %v1098 = vsel %vm418, %v1093, %v1097
      %s1099 = scalar_lea.vmem %s3, 26
      %v1100 = vld [vmem:[%s1099] sm:$0x3]
      %1101 = vst [vmem:[#allocation1] ss:$4 sm:$0xff] %v930
      %s1102 = scalar_lea.vmem [#allocation1], 1
      %1103 = vst [vmem:[%s1102] ss:$4 sm:$0xff] %v943
      %s1104 = scalar_lea.vmem [#allocation1], 2
      %1105 = vst [vmem:[%s1104] ss:$4 sm:$0xff] %v956
      %s1107 = scalar_lea.vmem [#allocation1], 3
      %1108 = vst [vmem:[%s1107] ss:$4 sm:$0xff] %v1098
      %v1109 = vld.sshfl [vmem:[#allocation1] sm:$0xff pattern:$0x73625140]
      %v1110 = vsel %vm485, %v1109, 0
      %v1113 = vsel %vm386, %v1100, 0
      %1115 = vmatpush.bf16.msra.mxu0 0
      %1116 = vmatpush.bf16.msra.mxu0 0
      %1117 = vmatpush.bf16.msra.mxu0 0
      %1118 = vmatpush.bf16.msra.mxu0 0
      %1119 = vmatpush.bf16.msra.mxu0 0
      %1120 = vmatpush.bf16.msra.mxu0 0
      %1121 = vmatpush.bf16.msra.mxu0 0
      %1122 = vmatpush.bf16.msra.mxu0 %v1113
      %1123 = vmatmul.bf16.gmra.mxu0 %v1110
      %v1124 = vpop.f32.mrf.mxu0
      %v1125 = vadd.f32 0.0, %v1124
      %v1126 = vpop.f32.mrf.mxu0
      %v1127 = vadd.f32 0.0, %v1126
      %1128 = vdwg.mxu0
      %v1129 = vadd.f32 %v1077, %v1125
      %v1130 = vadd.f32 %v1078, %v1127
      %v1132 = vrot.slane %v1082, 7
      %v1133 = vrot.slane %v1132, 2
      %v1134 = vrot.slane %v1085, 7
      %v1135 = vsel %vm542, %v1133, %v1134
      %s1136 = scalar_lea.vmem %s3, 28
      %v1137 = vld [vmem:[%s1136] sm:$0x3]
      %1138 = vst [vmem:[#allocation1] ss:$4 sm:$0xff] %v1003
      %s1139 = scalar_lea.vmem [#allocation1], 1
      %1140 = vst [vmem:[%s1139] ss:$4 sm:$0xff] %v1007
      %s1141 = scalar_lea.vmem [#allocation1], 2
      %1142 = vst [vmem:[%s1141] ss:$4 sm:$0xff] %v1011
      %s1144 = scalar_lea.vmem [#allocation1], 3
      %1145 = vst [vmem:[%s1144] ss:$4 sm:$0xff] %v1135
      %v1146 = vld.sshfl [vmem:[#allocation1] sm:$0xff pattern:$0x73625140]
      %v1147 = vsel %vm485, %v1146, 0
      %v1150 = vsel %vm386, %v1137, 0
      %1152 = vmatpush.bf16.msra.mxu0 0
      %1153 = vmatpush.bf16.msra.mxu0 0
      %1154 = vmatpush.bf16.msra.mxu0 0
      %1155 = vmatpush.bf16.msra.mxu0 0
      %1156 = vmatpush.bf16.msra.mxu0 0
      %1157 = vmatpush.bf16.msra.mxu0 0
      %1158 = vmatpush.bf16.msra.mxu0 0
      %1159 = vmatpush.bf16.msra.mxu0 %v1150
      %1160 = vmatmul.bf16.gmra.mxu0 %v1147
      %v1161 = vpop.f32.mrf.mxu0
      %v1162 = vadd.f32 0.0, %v1161
      %v1163 = vpop.f32.mrf.mxu0
      %v1164 = vadd.f32 0.0, %v1163
      %1165 = vdwg.mxu0
      %v1166 = vadd.f32 %v1129, %v1162
      %v1167 = vadd.f32 %v1130, %v1164
      %s1168 = scalar_lea.vmem %s3, 30
      %v1169 = vld [vmem:[%s1168] sm:$0x3]
      %1170 = vst [vmem:[#allocation1] ss:$4 sm:$0xff] %v838
      %s1171 = scalar_lea.vmem [#allocation1], 1
      %1172 = vst [vmem:[%s1171] ss:$4 sm:$0xff] %v839
      %s1173 = scalar_lea.vmem [#allocation1], 2
      %1174 = vst [vmem:[%s1173] ss:$4 sm:$0xff] %v840
      %s1176 = scalar_lea.vmem [#allocation1], 3
      %1177 = vst [vmem:[%s1176] ss:$4 sm:$0xff] %v841
      %v1178 = vld.sshfl [vmem:[#allocation1] sm:$0xff pattern:$0x73625140]
      %v1179 = vsel %vm485, %v1178, 0
      %v1182 = vsel %vm386, %v1169, 0
      %1184 = vmatpush.bf16.msra.mxu0 0
      %1185 = vmatpush.bf16.msra.mxu0 0
      %1186 = vmatpush.bf16.msra.mxu0 0
      %1187 = vmatpush.bf16.msra.mxu0 0
      %1188 = vmatpush.bf16.msra.mxu0 0
      %1189 = vmatpush.bf16.msra.mxu0 0
      %1190 = vmatpush.bf16.msra.mxu0 0
      %1191 = vmatpush.bf16.msra.mxu0 %v1182
      %1192 = vmatmul.bf16.gmra.mxu0 %v1179
      %v1193 = vpop.f32.mrf.mxu0
      %v1194 = vadd.f32 0.0, %v1193
      %v1195 = vpop.f32.mrf.mxu0
      %v1196 = vadd.f32 0.0, %v1195
      %1197 = vdwg.mxu0
      %v1198 = vadd.f32 %v1166, %v1194
      %v1199 = vadd.f32 %v1167, %v1196
      %v1201 = vrot.slane %v841, 2
      %v1203 = vsel %vm386, %v841, %v1201
      %v1204 = vsel %vm390, %v841, %v1201
      %v1206 = vrot.slane %v1204, 2
      %v1207 = vshrl.u32 %v1203, 16
      %v1209 = vrot.slane %v1207, 6
      %v1210 = vshll.u32 %v1203, 16
      %v1212 = vrot.slane %v1210, 7
      %v1213 = vor.u32 %v1209, %v1212
      %v1214 = vrot.slane %v1213, 2
      %v1216 = vshll.u32 %v1206, 16
      %v1218 = vrot.slane %v1216, 7
      %v1219 = vsel %vm418, %v1214, %v1218
      %s1220 = scalar_lea.vmem %s3, 32
      %v1221 = vld [vmem:[%s1220] sm:$0x3]
      %1222 = vst [vmem:[#allocation1] ss:$4 sm:$0xff] %v943
      %s1223 = scalar_lea.vmem [#allocation1], 1
      %1224 = vst [vmem:[%s1223] ss:$4 sm:$0xff] %v956
      %s1225 = scalar_lea.vmem [#allocation1], 2
      %1226 = vst [vmem:[%s1225] ss:$4 sm:$0xff] %v1098
      %s1228 = scalar_lea.vmem [#allocation1], 3
      %1229 = vst [vmem:[%s1228] ss:$4 sm:$0xff] %v1219
      %v1230 = vld.sshfl [vmem:[#allocation1] sm:$0xff pattern:$0x73625140]
      %v1231 = vsel %vm485, %v1230, 0
      %v1234 = vsel %vm386, %v1221, 0
      %1236 = vmatpush.bf16.msra.mxu0 0
      %1237 = vmatpush.bf16.msra.mxu0 0
      %1238 = vmatpush.bf16.msra.mxu0 0
      %1239 = vmatpush.bf16.msra.mxu0 0
      %1240 = vmatpush.bf16.msra.mxu0 0
      %1241 = vmatpush.bf16.msra.mxu0 0
      %1242 = vmatpush.bf16.msra.mxu0 0
      %1243 = vmatpush.bf16.msra.mxu0 %v1234
      %1244 = vmatmul.bf16.gmra.mxu0 %v1231
      %v1245 = vpop.f32.mrf.mxu0
      %v1246 = vadd.f32 0.0, %v1245
      %v1247 = vpop.f32.mrf.mxu0
      %v1248 = vadd.f32 0.0, %v1247
      %1249 = vdwg.mxu0
      %v1250 = vadd.f32 %v1198, %v1246
      %v1251 = vadd.f32 %v1199, %v1248
      %v1253 = vrot.slane %v1203, 7
      %v1254 = vrot.slane %v1253, 2
      %v1255 = vrot.slane %v1206, 7
      %v1256 = vsel %vm542, %v1254, %v1255
      %s1257 = scalar_lea.vmem %s3, 34
      %v1258 = vld [vmem:[%s1257] sm:$0x3]
      %1259 = vst [vmem:[#allocation1] ss:$4 sm:$0xff] %v1007
      %s1260 = scalar_lea.vmem [#allocation1], 1
      %1261 = vst [vmem:[%s1260] ss:$4 sm:$0xff] %v1011
      %s1262 = scalar_lea.vmem [#allocation1], 2
      %1263 = vst [vmem:[%s1262] ss:$4 sm:$0xff] %v1135
      %s1265 = scalar_lea.vmem [#allocation1], 3
      %1266 = vst [vmem:[%s1265] ss:$4 sm:$0xff] %v1256
      %v1267 = vld.sshfl [vmem:[#allocation1] sm:$0xff pattern:$0x73625140]
      %v1268 = vsel %vm485, %v1267, 0
      %v1271 = vsel %vm386, %v1258, 0
      %1273 = vmatpush.bf16.msra.mxu0 0
      %1274 = vmatpush.bf16.msra.mxu0 0
      %1275 = vmatpush.bf16.msra.mxu0 0
      %1276 = vmatpush.bf16.msra.mxu0 0
      %1277 = vmatpush.bf16.msra.mxu0 0
      %1278 = vmatpush.bf16.msra.mxu0 0
      %1279 = vmatpush.bf16.msra.mxu0 0
      %1280 = vmatpush.bf16.msra.mxu0 %v1271
      %1281 = vmatmul.bf16.gmra.mxu0 %v1268
      %v1282 = vpop.f32.mrf.mxu0
      %v1283 = vadd.f32 0.0, %v1282
      %v1284 = vpop.f32.mrf.mxu0
      %v1285 = vadd.f32 0.0, %v1284
      %1286 = vdwg.mxu0
      %v1287 = vadd.f32 %v1250, %v1283
      %v1288 = vadd.f32 %v1251, %v1285
      %v1289 = vld [vmem:[%s359] sm:$0x7]
      %v1290 = vld [vmem:[%s359 + $0x4] sm:$0x7]
      %v1291 = vld [vmem:[%s359 + $0x8] sm:$0x7]
      %v1292 = vld [vmem:[%s359 + $0xc] sm:$0x7]
      %v1293 = vld [vmem:[%s359 + $0x10] sm:$0x7]
      %v1294 = vld [vmem:[%s359 + $0x14] sm:$0x7]
      %s1295 = scalar_lea.vmem %s3, 36
      %v1296 = vld [vmem:[%s1295] sm:$0x3]
      %1298 = vst [vmem:[#allocation1] ss:$4 sm:$0xff] %v1289
      %s1300 = scalar_lea.vmem [#allocation1], 1
      %1301 = vst [vmem:[%s1300] ss:$4 sm:$0xff] %v1290
      %s1303 = scalar_lea.vmem [#allocation1], 2
      %1304 = vst [vmem:[%s1303] ss:$4 sm:$0xff] %v1291
      %s1306 = scalar_lea.vmem [#allocation1], 3
      %1307 = vst [vmem:[%s1306] ss:$4 sm:$0xff] %v1292
      %v1308 = vld.sshfl [vmem:[#allocation1] sm:$0xff pattern:$0x73625140]
      %v1309 = vsel %vm485, %v1308, 0
      %v1312 = vsel %vm386, %v1296, 0
      %1314 = vmatpush.bf16.msra.mxu0 0
      %1315 = vmatpush.bf16.msra.mxu0 0
      %1316 = vmatpush.bf16.msra.mxu0 0
      %1317 = vmatpush.bf16.msra.mxu0 0
      %1318 = vmatpush.bf16.msra.mxu0 0
      %1319 = vmatpush.bf16.msra.mxu0 0
      %1320 = vmatpush.bf16.msra.mxu0 0
      %1321 = vmatpush.bf16.msra.mxu0 %v1312
      %1322 = vmatmul.bf16.gmra.mxu0 %v1309
      %v1323 = vpop.f32.mrf.mxu0
      %v1324 = vadd.f32 0.0, %v1323
      %v1325 = vpop.f32.mrf.mxu0
      %v1326 = vadd.f32 0.0, %v1325
      %1327 = vdwg.mxu0
      %v1328 = vadd.f32 %v1287, %v1324
      %v1329 = vadd.f32 %v1288, %v1326
      %v1334 = vrot.slane %v1289, 2
      %v1335 = vrot.slane %v1290, 2
      %v1336 = vrot.slane %v1291, 2
      %v1337 = vrot.slane %v1292, 2
      %v1339 = vsel %vm386, %v1289, %v1334
      %v1340 = vsel %vm390, %v1289, %v1334
      %v1342 = vrot.slane %v1340, 2
      %v1344 = vsel %vm386, %v1290, %v1335
      %v1345 = vsel %vm390, %v1290, %v1335
      %v1347 = vrot.slane %v1345, 2
      %v1349 = vsel %vm386, %v1291, %v1336
      %v1350 = vsel %vm390, %v1291, %v1336
      %v1352 = vrot.slane %v1350, 2
      %v1354 = vsel %vm386, %v1292, %v1337
      %v1355 = vsel %vm390, %v1292, %v1337
      %v1357 = vrot.slane %v1355, 2
      %v1358 = vshrl.u32 %v1339, 16
      %v1360 = vrot.slane %v1358, 6
      %v1361 = vshll.u32 %v1339, 16
      %v1363 = vrot.slane %v1361, 7
      %v1364 = vor.u32 %v1360, %v1363
      %v1365 = vrot.slane %v1364, 2
      %v1367 = vshll.u32 %v1342, 16
      %v1369 = vrot.slane %v1367, 7
      %v1370 = vsel %vm418, %v1365, %v1369
      %v1371 = vshrl.u32 %v1344, 16
      %v1373 = vrot.slane %v1371, 6
      %v1374 = vshll.u32 %v1344, 16
      %v1376 = vrot.slane %v1374, 7
      %v1377 = vor.u32 %v1373, %v1376
      %v1378 = vrot.slane %v1377, 2
      %v1380 = vshll.u32 %v1347, 16
      %v1382 = vrot.slane %v1380, 7
      %v1383 = vsel %vm418, %v1378, %v1382
      %v1384 = vshrl.u32 %v1349, 16
      %v1386 = vrot.slane %v1384, 6
      %v1387 = vshll.u32 %v1349, 16
      %v1389 = vrot.slane %v1387, 7
      %v1390 = vor.u32 %v1386, %v1389
      %v1391 = vrot.slane %v1390, 2
      %v1393 = vshll.u32 %v1352, 16
      %v1395 = vrot.slane %v1393, 7
      %v1396 = vsel %vm418, %v1391, %v1395
      %v1397 = vshrl.u32 %v1354, 16
      %v1399 = vrot.slane %v1397, 6
      %v1400 = vshll.u32 %v1354, 16
      %v1402 = vrot.slane %v1400, 7
      %v1403 = vor.u32 %v1399, %v1402
      %v1404 = vrot.slane %v1403, 2
      %v1406 = vshll.u32 %v1357, 16
      %v1408 = vrot.slane %v1406, 7
      %v1409 = vsel %vm418, %v1404, %v1408
      %s1410 = scalar_lea.vmem %s3, 38
      %v1411 = vld [vmem:[%s1410] sm:$0x3]
      %1413 = vst [vmem:[#allocation1] ss:$4 sm:$0xff] %v1370
      %s1415 = scalar_lea.vmem [#allocation1], 1
      %1416 = vst [vmem:[%s1415] ss:$4 sm:$0xff] %v1383
      %s1418 = scalar_lea.vmem [#allocation1], 2
      %1419 = vst [vmem:[%s1418] ss:$4 sm:$0xff] %v1396
      %s1421 = scalar_lea.vmem [#allocation1], 3
      %1422 = vst [vmem:[%s1421] ss:$4 sm:$0xff] %v1409
      %v1423 = vld.sshfl [vmem:[#allocation1] sm:$0xff pattern:$0x73625140]
      %v1424 = vsel %vm485, %v1423, 0
      %v1427 = vsel %vm386, %v1411, 0
      %1429 = vmatpush.bf16.msra.mxu0 0
      %1430 = vmatpush.bf16.msra.mxu0 0
      %1431 = vmatpush.bf16.msra.mxu0 0
      %1432 = vmatpush.bf16.msra.mxu0 0
      %1433 = vmatpush.bf16.msra.mxu0 0
      %1434 = vmatpush.bf16.msra.mxu0 0
      %1435 = vmatpush.bf16.msra.mxu0 0
      %1436 = vmatpush.bf16.msra.mxu0 %v1427
      %1437 = vmatmul.bf16.gmra.mxu0 %v1424
      %v1438 = vpop.f32.mrf.mxu0
      %v1439 = vadd.f32 0.0, %v1438
      %v1440 = vpop.f32.mrf.mxu0
      %v1441 = vadd.f32 0.0, %v1440
      %1442 = vdwg.mxu0
      %v1443 = vadd.f32 %v1328, %v1439
      %v1444 = vadd.f32 %v1329, %v1441
      %v1449 = vrot.slane %v1339, 7
      %v1450 = vrot.slane %v1449, 2
      %v1451 = vrot.slane %v1342, 7
      %v1452 = vsel %vm542, %v1450, %v1451
      %v1453 = vrot.slane %v1344, 7
      %v1454 = vrot.slane %v1453, 2
      %v1455 = vrot.slane %v1347, 7
      %v1456 = vsel %vm542, %v1454, %v1455
      %v1457 = vrot.slane %v1349, 7
      %v1458 = vrot.slane %v1457, 2
      %v1459 = vrot.slane %v1352, 7
      %v1460 = vsel %vm542, %v1458, %v1459
      %v1461 = vrot.slane %v1354, 7
      %v1462 = vrot.slane %v1461, 2
      %v1463 = vrot.slane %v1357, 7
      %v1464 = vsel %vm542, %v1462, %v1463
      %s1465 = scalar_lea.vmem %s3, 40
      %v1466 = vld [vmem:[%s1465] sm:$0x3]
      %1468 = vst [vmem:[#allocation1] ss:$4 sm:$0xff] %v1452
      %s1470 = scalar_lea.vmem [#allocation1], 1
      %1471 = vst [vmem:[%s1470] ss:$4 sm:$0xff] %v1456
      %s1473 = scalar_lea.vmem [#allocation1], 2
      %1474 = vst [vmem:[%s1473] ss:$4 sm:$0xff] %v1460
      %s1476 = scalar_lea.vmem [#allocation1], 3
      %1477 = vst [vmem:[%s1476] ss:$4 sm:$0xff] %v1464
      %v1478 = vld.sshfl [vmem:[#allocation1] sm:$0xff pattern:$0x73625140]
      %v1479 = vsel %vm485, %v1478, 0
      %v1482 = vsel %vm386, %v1466, 0
      %1484 = vmatpush.bf16.msra.mxu0 0
      %1485 = vmatpush.bf16.msra.mxu0 0
      %1486 = vmatpush.bf16.msra.mxu0 0
      %1487 = vmatpush.bf16.msra.mxu0 0
      %1488 = vmatpush.bf16.msra.mxu0 0
      %1489 = vmatpush.bf16.msra.mxu0 0
      %1490 = vmatpush.bf16.msra.mxu0 0
      %1491 = vmatpush.bf16.msra.mxu0 %v1482
      %1492 = vmatmul.bf16.gmra.mxu0 %v1479
      %v1493 = vpop.f32.mrf.mxu0
      %v1494 = vadd.f32 0.0, %v1493
      %v1495 = vpop.f32.mrf.mxu0
      %v1496 = vadd.f32 0.0, %v1495
      %1497 = vdwg.mxu0
      %v1498 = vadd.f32 %v1443, %v1494
      %v1499 = vadd.f32 %v1444, %v1496
      %s1500 = scalar_lea.vmem %s3, 42
      %v1501 = vld [vmem:[%s1500] sm:$0x3]
      %1502 = vst [vmem:[#allocation1] ss:$4 sm:$0xff] %v1290
      %s1503 = scalar_lea.vmem [#allocation1], 1
      %1504 = vst [vmem:[%s1503] ss:$4 sm:$0xff] %v1291
      %s1505 = scalar_lea.vmem [#allocation1], 2
      %1506 = vst [vmem:[%s1505] ss:$4 sm:$0xff] %v1292
      %s1508 = scalar_lea.vmem [#allocation1], 3
      %1509 = vst [vmem:[%s1508] ss:$4 sm:$0xff] %v1293
      %v1510 = vld.sshfl [vmem:[#allocation1] sm:$0xff pattern:$0x73625140]
      %v1511 = vsel %vm485, %v1510, 0
      %v1514 = vsel %vm386, %v1501, 0
      %1516 = vmatpush.bf16.msra.mxu0 0
      %1517 = vmatpush.bf16.msra.mxu0 0
      %1518 = vmatpush.bf16.msra.mxu0 0
      %1519 = vmatpush.bf16.msra.mxu0 0
      %1520 = vmatpush.bf16.msra.mxu0 0
      %1521 = vmatpush.bf16.msra.mxu0 0
      %1522 = vmatpush.bf16.msra.mxu0 0
      %1523 = vmatpush.bf16.msra.mxu0 %v1514
      %1524 = vmatmul.bf16.gmra.mxu0 %v1511
      %v1525 = vpop.f32.mrf.mxu0
      %v1526 = vadd.f32 0.0, %v1525
      %v1527 = vpop.f32.mrf.mxu0
      %v1528 = vadd.f32 0.0, %v1527
      %1529 = vdwg.mxu0
      %v1530 = vadd.f32 %v1498, %v1526
      %v1531 = vadd.f32 %v1499, %v1528
      %v1533 = vrot.slane %v1293, 2
      %v1535 = vsel %vm386, %v1293, %v1533
      %v1536 = vsel %vm390, %v1293, %v1533
      %v1538 = vrot.slane %v1536, 2
      %v1539 = vshrl.u32 %v1535, 16
      %v1541 = vrot.slane %v1539, 6
      %v1542 = vshll.u32 %v1535, 16
      %v1544 = vrot.slane %v1542, 7
      %v1545 = vor.u32 %v1541, %v1544
      %v1546 = vrot.slane %v1545, 2
      %v1548 = vshll.u32 %v1538, 16
      %v1550 = vrot.slane %v1548, 7
      %v1551 = vsel %vm418, %v1546, %v1550
      %s1552 = scalar_lea.vmem %s3, 44
      %v1553 = vld [vmem:[%s1552] sm:$0x3]
      %1554 = vst [vmem:[#allocation1] ss:$4 sm:$0xff] %v1383
      %s1555 = scalar_lea.vmem [#allocation1], 1
      %1556 = vst [vmem:[%s1555] ss:$4 sm:$0xff] %v1396
      %s1557 = scalar_lea.vmem [#allocation1], 2
      %1558 = vst [vmem:[%s1557] ss:$4 sm:$0xff] %v1409
      %s1560 = scalar_lea.vmem [#allocation1], 3
      %1561 = vst [vmem:[%s1560] ss:$4 sm:$0xff] %v1551
      %v1562 = vld.sshfl [vmem:[#allocation1] sm:$0xff pattern:$0x73625140]
      %v1563 = vsel %vm485, %v1562, 0
      %v1566 = vsel %vm386, %v1553, 0
      %1568 = vmatpush.bf16.msra.mxu0 0
      %1569 = vmatpush.bf16.msra.mxu0 0
      %1570 = vmatpush.bf16.msra.mxu0 0
      %1571 = vmatpush.bf16.msra.mxu0 0
      %1572 = vmatpush.bf16.msra.mxu0 0
      %1573 = vmatpush.bf16.msra.mxu0 0
      %1574 = vmatpush.bf16.msra.mxu0 0
      %1575 = vmatpush.bf16.msra.mxu0 %v1566
      %1576 = vmatmul.bf16.gmra.mxu0 %v1563
      %v1577 = vpop.f32.mrf.mxu0
      %v1578 = vadd.f32 0.0, %v1577
      %v1579 = vpop.f32.mrf.mxu0
      %v1580 = vadd.f32 0.0, %v1579
      %1581 = vdwg.mxu0
      %v1582 = vadd.f32 %v1530, %v1578
      %v1583 = vadd.f32 %v1531, %v1580
      %v1585 = vrot.slane %v1535, 7
      %v1586 = vrot.slane %v1585, 2
      %v1587 = vrot.slane %v1538, 7
      %v1588 = vsel %vm542, %v1586, %v1587
      %s1589 = scalar_lea.vmem %s3, 46
      %v1590 = vld [vmem:[%s1589] sm:$0x3]
      %1591 = vst [vmem:[#allocation1] ss:$4 sm:$0xff] %v1456
      %s1592 = scalar_lea.vmem [#allocation1], 1
      %1593 = vst [vmem:[%s1592] ss:$4 sm:$0xff] %v1460
      %s1594 = scalar_lea.vmem [#allocation1], 2
      %1595 = vst [vmem:[%s1594] ss:$4 sm:$0xff] %v1464
      %s1597 = scalar_lea.vmem [#allocation1], 3
      %1598 = vst [vmem:[%s1597] ss:$4 sm:$0xff] %v1588
      %v1599 = vld.sshfl [vmem:[#allocation1] sm:$0xff pattern:$0x73625140]
      %v1600 = vsel %vm485, %v1599, 0
      %v1603 = vsel %vm386, %v1590, 0
      %1605 = vmatpush.bf16.msra.mxu0 0
      %1606 = vmatpush.bf16.msra.mxu0 0
      %1607 = vmatpush.bf16.msra.mxu0 0
      %1608 = vmatpush.bf16.msra.mxu0 0
      %1609 = vmatpush.bf16.msra.mxu0 0
      %1610 = vmatpush.bf16.msra.mxu0 0
      %1611 = vmatpush.bf16.msra.mxu0 0
      %1612 = vmatpush.bf16.msra.mxu0 %v1603
      %1613 = vmatmul.bf16.gmra.mxu0 %v1600
      %v1614 = vpop.f32.mrf.mxu0
      %v1615 = vadd.f32 0.0, %v1614
      %v1616 = vpop.f32.mrf.mxu0
      %v1617 = vadd.f32 0.0, %v1616
      %1618 = vdwg.mxu0
      %v1619 = vadd.f32 %v1582, %v1615
      %v1620 = vadd.f32 %v1583, %v1617
      %s1621 = scalar_lea.vmem %s3, 48
      %v1622 = vld [vmem:[%s1621] sm:$0x3]
      %1623 = vst [vmem:[#allocation1] ss:$4 sm:$0xff] %v1291
      %s1624 = scalar_lea.vmem [#allocation1], 1
      %1625 = vst [vmem:[%s1624] ss:$4 sm:$0xff] %v1292
      %s1626 = scalar_lea.vmem [#allocation1], 2
      %1627 = vst [vmem:[%s1626] ss:$4 sm:$0xff] %v1293
      %s1629 = scalar_lea.vmem [#allocation1], 3
      %1630 = vst [vmem:[%s1629] ss:$4 sm:$0xff] %v1294
      %v1631 = vld.sshfl [vmem:[#allocation1] sm:$0xff pattern:$0x73625140]
      %v1632 = vsel %vm485, %v1631, 0
      %v1635 = vsel %vm386, %v1622, 0
      %1637 = vmatpush.bf16.msra.mxu0 0
      %1638 = vmatpush.bf16.msra.mxu0 0
      %1639 = vmatpush.bf16.msra.mxu0 0
      %1640 = vmatpush.bf16.msra.mxu0 0
      %1641 = vmatpush.bf16.msra.mxu0 0
      %1642 = vmatpush.bf16.msra.mxu0 0
      %1643 = vmatpush.bf16.msra.mxu0 0
      %1644 = vmatpush.bf16.msra.mxu0 %v1635
      %1645 = vmatmul.bf16.gmra.mxu0 %v1632
      %v1646 = vpop.f32.mrf.mxu0
      %v1647 = vadd.f32 0.0, %v1646
      %v1648 = vpop.f32.mrf.mxu0
      %v1649 = vadd.f32 0.0, %v1648
      %1650 = vdwg.mxu0
      %v1651 = vadd.f32 %v1619, %v1647
      %v1652 = vadd.f32 %v1620, %v1649
      %v1654 = vrot.slane %v1294, 2
      %v1656 = vsel %vm386, %v1294, %v1654
      %v1657 = vsel %vm390, %v1294, %v1654
      %v1659 = vrot.slane %v1657, 2
      %v1660 = vshrl.u32 %v1656, 16
      %v1662 = vrot.slane %v1660, 6
      %v1663 = vshll.u32 %v1656, 16
      %v1665 = vrot.slane %v1663, 7
      %v1666 = vor.u32 %v1662, %v1665
      %v1667 = vrot.slane %v1666, 2
      %v1669 = vshll.u32 %v1659, 16
      %v1671 = vrot.slane %v1669, 7
      %v1672 = vsel %vm418, %v1667, %v1671
      %s1673 = scalar_lea.vmem %s3, 50
      %v1674 = vld [vmem:[%s1673] sm:$0x3]
      %1675 = vst [vmem:[#allocation1] ss:$4 sm:$0xff] %v1396
      %s1676 = scalar_lea.vmem [#allocation1], 1
      %1677 = vst [vmem:[%s1676] ss:$4 sm:$0xff] %v1409
      %s1678 = scalar_lea.vmem [#allocation1], 2
      %1679 = vst [vmem:[%s1678] ss:$4 sm:$0xff] %v1551
      %s1681 = scalar_lea.vmem [#allocation1], 3
      %1682 = vst [vmem:[%s1681] ss:$4 sm:$0xff] %v1672
      %v1683 = vld.sshfl [vmem:[#allocation1] sm:$0xff pattern:$0x73625140]
      %v1684 = vsel %vm485, %v1683, 0
      %v1687 = vsel %vm386, %v1674, 0
      %1689 = vmatpush.bf16.msra.mxu0 0
      %1690 = vmatpush.bf16.msra.mxu0 0
      %1691 = vmatpush.bf16.msra.mxu0 0
      %1692 = vmatpush.bf16.msra.mxu0 0
      %1693 = vmatpush.bf16.msra.mxu0 0
      %1694 = vmatpush.bf16.msra.mxu0 0
      %1695 = vmatpush.bf16.msra.mxu0 0
      %1696 = vmatpush.bf16.msra.mxu0 %v1687
      %1697 = vmatmul.bf16.gmra.mxu0 %v1684
      %v1698 = vpop.f32.mrf.mxu0
      %v1699 = vadd.f32 0.0, %v1698
      %v1700 = vpop.f32.mrf.mxu0
      %v1701 = vadd.f32 0.0, %v1700
      %1702 = vdwg.mxu0
      %v1703 = vadd.f32 %v1651, %v1699
      %v1704 = vadd.f32 %v1652, %v1701
      %v1706 = vrot.slane %v1656, 7
      %v1707 = vrot.slane %v1706, 2
      %v1708 = vrot.slane %v1659, 7
      %v1709 = vsel %vm542, %v1707, %v1708
      %s1710 = scalar_lea.vmem %s3, 52
      %v1711 = vld [vmem:[%s1710] sm:$0x3]
      %1712 = vst [vmem:[#allocation1] ss:$4 sm:$0xff] %v1460
      %s1713 = scalar_lea.vmem [#allocation1], 1
      %1714 = vst [vmem:[%s1713] ss:$4 sm:$0xff] %v1464
      %s1715 = scalar_lea.vmem [#allocation1], 2
      %1716 = vst [vmem:[%s1715] ss:$4 sm:$0xff] %v1588
      %s1718 = scalar_lea.vmem [#allocation1], 3
      %1719 = vst [vmem:[%s1718] ss:$4 sm:$0xff] %v1709
      %v1720 = vld.sshfl [vmem:[#allocation1] sm:$0xff pattern:$0x73625140]
      %v1721 = vsel %vm485, %v1720, 0
      %v1724 = vsel %vm386, %v1711, 0
      %1726 = vmatpush.bf16.msra.mxu0 0
      %1727 = vmatpush.bf16.msra.mxu0 0
      %1728 = vmatpush.bf16.msra.mxu0 0
      %1729 = vmatpush.bf16.msra.mxu0 0
      %1730 = vmatpush.bf16.msra.mxu0 0
      %1731 = vmatpush.bf16.msra.mxu0 0
      %1732 = vmatpush.bf16.msra.mxu0 0
      %1733 = vmatpush.bf16.msra.mxu0 %v1724
      %1734 = vmatmul.bf16.gmra.mxu0 %v1721
      %v1735 = vpop.f32.mrf.mxu0
      %v1736 = vadd.f32 0.0, %v1735
      %v1737 = vpop.f32.mrf.mxu0
      %v1738 = vadd.f32 0.0, %v1737
      %1739 = vdwg.mxu0
      %v1740 = vadd.f32 %v1703, %v1736
      %v1741 = vadd.f32 %v1704, %v1738
      %v1742 = vld [vmem:[%s4] sm:$0x1]
      %v1744 = vperm.slane %v1742, 0
      %v1746 = vmul.f32 %v1740, %v1744
      %v1747 = vmul.f32 %v1741, %v1744
      %v1748 = vld [vmem:[%s5] sm:$0x1]
      %v1750 = vperm.slane %v1748, 0
      %v1752 = vadd.f32 %v1746, %v1750
      %v1753 = vadd.f32 %v1747, %v1750
      %v1754 = vmax.f32 %v1752, 0.0
      %v1755 = vmax.f32 %v1753, 0.0
      %v1758 = vrot.slane %v1754, 4
      %v1759 = vrot.slane %v1755, 4
      %v1762 = vpack.c.bf16 %v1754, %v1754
      %v1763 = vpack.c.bf16 %v1758, %v1758
      %v1764 = vpack.c.bf16 %v1755, %v1755
      %v1765 = vpack.c.bf16 %v1759, %v1759
      %vm1766 = vcmask 25600
      %1767 = vst.msk [vmem:[%s369] sm:$0x3] %vm1766, %v1762
      %1768 = vst.msk [vmem:[%s369 + $0x2] sm:$0x3] %vm1766, %v1763
      %1769 = vst.msk [vmem:[%s369 + $0x4] sm:$0x3] %vm1766, %v1764
      %1770 = vst.msk [vmem:[%s369 + $0x6] sm:$0x3] %vm1766, %v1765
      %p1771 = scmp.lt.s32.totalorder %s21, 1
      %s1772 = scalar_select %p1771, %s21, 1
      %p1773 = scmp.lt.s32.totalorder %s22, 3
      %s1774 = scalar_select %p1773, %s22, 3
      %s1775 = smul.addr %s1774, 4
      %s1776 = smul.addr %s1772, 16
      %s1777 = sadd.s32 %s1775, %s1776
      %s1778 = smul.addr %s1777, 2
      %s1779 = scalar_lea.vmem %s6, %s1778
      // Predicated region
      $region45: #{bottleneck3d_forward.4} parent=43 // pred_check
        %p1780 = pneg %p200
      $region46: #{bottleneck3d_forward.4} parent=43 // pred_check_branch
        %1782 = sbr.rel (%p1780) target = $region48
      $region47: #{bottleneck3d_forward.4} parent=43 // pred_region
        _
      $region48: #{bottleneck3d_forward.4} parent=43 // pred_fallthru
        _
    $region44: #{bottleneck3d_forward.4} parent=5 // pred_fallthru
      _
    %p1783 = scmp.le.s32.totalorder 2, %s12
    // Predicated region
    $region49: #{bottleneck3d_forward.4} parent=5 // pred_check
      %p1784 = pneg %p1783
    $region50: #{bottleneck3d_forward.4} parent=5 // pred_check_branch
      %1786 = sbr.rel (%p1784) target = $region52
    $region51: #{bottleneck3d_forward.4} parent=5 // pred_region
      %s1787 = ssub.s32 %s12, 2
      // Predicated region
      $region53: #{bottleneck3d_forward.4} parent=51 // pred_check
        %p1788 = pneg %p206
      $region54: #{bottleneck3d_forward.4} parent=51 // pred_check_branch
        %1790 = sbr.rel (%p1788) target = $region56
      $region55: #{bottleneck3d_forward.4} parent=51 // pred_region
        %p1791 = scmp.lt.s32.totalorder %s23, 1
        %s1792 = scalar_select %p1791, %s23, 1
        %p1793 = scmp.lt.s32.totalorder %s24, 3
        %s1794 = scalar_select %p1793, %s24, 3
        %s1795 = smul.addr %s1794, 4
        %s1796 = smul.addr %s1792, 16
        %s1797 = sadd.s32 %s1795, %s1796
        %s1798 = smul.addr %s1797, 2
        %s1799 = scalar_lea.vmem %s6, %s1798
      $region56: #{bottleneck3d_forward.4} parent=51 // pred_fallthru
        _
    $region52: #{bottleneck3d_forward.4} parent=5 // pred_fallthru
      _
  $region6: #{bottleneck3d_forward.4} parent=0 // loop_footer
    %s16 = sadd.s32 1, %s12
  $region7: #{bottleneck3d_forward.4} parent=0 // loop_footer_branch
    %11 = sbr.rel target = $region3
  $region8: #{bottleneck3d_forward.4} parent=0 // loop_exit
    _

</llo_original>
